<compile_context>
chip_gen: v6e
topology: v6e:2x2x1
jax: 0.10.0
libtpu: 0.0.40
codegen_flags: <defaults>
</compile_context>

<pallas_src>
import functools

import jax
import jax.numpy as jnp
from jax.experimental import pallas as pl
from jax.experimental.pallas import tpu as pltpu


# Row/col "streams" of the 3x3 conv on the phase-decomposed deconv output:
# (phase parity, shift) pairs in a fixed order shared by kernel and wrapper.
_STREAMS = ((1, -1), (0, 0), (1, 0), (0, 1))
# For output parity 0/1: stream index -> conv kernel tap index (dh or dw).
_DH_OF_STREAM = ({0: 0, 1: 1, 2: 2}, {1: 0, 2: 1, 3: 2})


def _upsample_fused_kernel(x_ref, w1_ref, b1_ref, w2_ref, b2_ref, m_ref, o_ref,
                           *, H, W, C, C2, op_h, op_w):
    """relu(conv3x3(relu(deconv3x3_s2(x)))) for one batch element.

    Positions are folded into the 128-lane axis (length H*W); channels/phases
    live on sublanes, so all elementwise work and stores are lane-dense.

    x_ref : (1, C, H*W)     NCHW input, spatially flattened
    w1_ref: (4, 4C, C)      deconv taps: x-shift s -> 4 stacked y phases
    b1_ref: (4C, 1)
    w2_ref: (16, 4*C2, C)   conv taps: shifted y view k -> 4 output phases
    b2_ref: (4*C2, 1)
    m_ref : (4, H*W)        {0,1} masks zeroing row 0 / row H-1 / col 0 / col W-1
    o_ref : (1, 4*C2, H*W)  phases: o[0, (2a+b)*C2 + c, u*W+v] = z[c, 2u+a, 2v+b]
    """
    HW = H * W
    f32 = jnp.float32

    def mm(w, a):
        return jnp.dot(w, a, preferred_element_type=f32)

    def shift(arr, d):
        # result[:, i] = arr[:, (i + d) % HW]   (wrap-around is masked off by
        # the caller).  pltpu.roll follows jnp.roll semantics
        # (out[i] = in[i - shift]), so roll by (-d) mod HW.
        if d == 0:
            return arr
        return pltpu.roll(arr, (-d) % HW, axis=1)

    m_up = m_ref[0:1, :]      # 0 where u == 0
    m_down = m_ref[1:2, :]    # 0 where u == H-1
    m_left = m_ref[2:3, :]    # 0 where v == 0
    m_right = m_ref[3:4, :]   # 0 where v == W-1

    x = x_ref[0]                                    # (C, HW)
    xs = (x,                                        # x[u, v]
          shift(x, 1) * m_right,                    # x[u, v+1]
          shift(x, W) * m_down,                     # x[u+1, v]
          shift(x, W + 1) * (m_down * m_right))     # x[u+1, v+1]

    # ---- transposed conv (stride 2): all 4 sub-pixel phases stacked along M
    acc1 = mm(w1_ref[0], xs[0])
    for s in range(1, 4):
        acc1 = acc1 + mm(w1_ref[s], xs[s])
    y = jnp.maximum(acc1 + b1_ref[...], 0.0)        # (4C, HW), phases on rows

    # ---- second conv (3x3, pad 1) on the phase-decomposed y ----------------
    # Each of the 16 shifted phase views is built lazily and feeds all four
    # output phases at once via the host-packed (4*C2, C) weight block.
    # (The du==0 / dv==0 extra masks implement output_padding==0: the last odd
    #  deconv row/col does not exist, so the conv must see zeros there.)
    acc2 = None
    for r, (a, du) in enumerate(_STREAMS):
        rm = (m_up if du == -1 else
              m_down if du == 1 else
              m_down if (op_h == 0 and a == 1) else None)
        for c, (b, dv) in enumerate(_STREAMS):
            cm = (m_left if dv == -1 else
                  m_right if dv == 1 else
                  m_right if (op_w == 0 and b == 1) else None)
            p = 2 * a + b
            view = shift(y[p * C:(p + 1) * C, :], du * W + dv)
            msk = rm if cm is None else (cm if rm is None else rm * cm)
            if msk is not None:
                view = view * msk
            term = mm(w2_ref[4 * r + c], view)
            acc2 = term if acc2 is None else acc2 + term

    o_ref[0] = jnp.maximum(acc2 + b2_ref[...], 0.0).astype(o_ref.dtype)


def upsample_forward(x_nchw, w_deconv, b_deconv, w_conv, b_conv, output_size,
                     kernel_size=3, stride=2, padding=1):
    """Pallas implementation of UpSample.forward (NCHW in/out, torch weights).

    x_nchw:   (N, C, H, W)
    w_deconv: (C, C, 3, 3)     torch ConvTranspose2d weight (in, out, kh, kw)
    w_conv:   (C//2, C, 3, 3)  torch Conv2d weight (out, in, kh, kw)
    output_size: (H_out, W_out) target size of the transposed conv.
    """
    assert kernel_size == 3 and stride == 2 and padding == 1, \
        "kernel is specialized to the module defaults (k=3, s=2, p=1)"
    N, C, H, W = x_nchw.shape
    C2 = w_conv.shape[0]
    HW = H * W
    Hout, Wout = output_size
    op_h = Hout - (2 * H - 1)
    op_w = Wout - (2 * W - 1)
    assert 0 <= op_h < stride and 0 <= op_w < stride, "invalid output_size"

    f32 = jnp.float32
    x_flat = x_nchw.astype(f32).reshape(N, C, HW)       # NCHW, free reshape

    # ---- pack deconv taps: w1[s] maps x-shift s -> the 4 stacked y phases --
    # phase p = 2a+b; shift s indexes [x, x(.,v+1), x(u+1,.), x(u+1,v+1)].
    dtaps = {(0, 0): (1, 1),
             (1, 0): (1, 2), (1, 1): (1, 0),
             (2, 0): (2, 1), (2, 2): (0, 1),
             (3, 0): (2, 2), (3, 1): (2, 0), (3, 2): (0, 2), (3, 3): (0, 0)}
    zC = jnp.zeros((C, C), f32)
    w1 = jnp.stack([
        jnp.concatenate(
            [w_deconv[:, :, dtaps[p, s][0], dtaps[p, s][1]].astype(f32).T
             if (p, s) in dtaps else zC
             for p in range(4)], axis=0)
        for s in range(4)])                              # (4, 4C, C)
    b1 = jnp.tile(b_deconv.astype(f32), 4).reshape(4 * C, 1)

    # ---- pack conv taps: w2[k] maps shifted y-view k -> the 4 output phases
    zC2 = jnp.zeros((C2, C), f32)
    w2_blocks = []
    for r in range(4):
        for c in range(4):
            blocks = []
            for alpha in range(2):
                for beta in range(2):
                    dh = _DH_OF_STREAM[alpha].get(r)
                    dw = _DH_OF_STREAM[beta].get(c)
                    blocks.append(zC2 if dh is None or dw is None
                                  else w_conv[:, :, dh, dw].astype(f32))
            w2_blocks.append(jnp.concatenate(blocks, axis=0))   # (4*C2, C)
    w2 = jnp.stack(w2_blocks)                            # (16, 4*C2, C)
    b2 = jnp.tile(b_conv.astype(f32), 4).reshape(4 * C2, 1)

    # ---- 0/1 boundary masks for the lane-rolled shifts ---------------------
    pos = jnp.arange(HW, dtype=jnp.int32)
    u, v = pos // W, pos % W
    masks = jnp.stack([(u != 0), (u != H - 1),
                       (v != 0), (v != W - 1)]).astype(f32)      # (4, HW)

    kernel = functools.partial(_upsample_fused_kernel, H=H, W=W, C=C, C2=C2,
                               op_h=op_h, op_w=op_w)

    flops = 2 * N * HW * (4 * 4 * C * C + 16 * 4 * C2 * C)
    bytes_accessed = 4 * (x_flat.size + w1.size + b1.size + w2.size + b2.size
                          + masks.size + N * 4 * C2 * HW)

    zph = pl.pallas_call(
        kernel,
        out_shape=jax.ShapeDtypeStruct((N, 4 * C2, HW), f32),
        grid_spec=pltpu.PrefetchScalarGridSpec(
            num_scalar_prefetch=0,
            grid=(N,),
            in_specs=[
                pl.BlockSpec((1, C, HW), lambda n: (n, 0, 0)),
                pl.BlockSpec((4, 4 * C, C), lambda n: (0, 0, 0)),
                pl.BlockSpec((4 * C, 1), lambda n: (0, 0)),
                pl.BlockSpec((16, 4 * C2, C), lambda n: (0, 0, 0)),
                pl.BlockSpec((4 * C2, 1), lambda n: (0, 0)),
                pl.BlockSpec((4, HW), lambda n: (0, 0)),
            ],
            out_specs=pl.BlockSpec((1, 4 * C2, HW), lambda n: (n, 0, 0)),
        ),
        compiler_params=pltpu.CompilerParams(
            dimension_semantics=("parallel",),
            vmem_limit_bytes=64 * 1024 * 1024),
        cost_estimate=pl.CostEstimate(flops=flops, transcendentals=0,
                                      bytes_accessed=bytes_accessed),
    )(x_flat, w1, b1, w2, b2, masks)

    # Un-shuffle the sub-pixel phases and convert to NCHW in one transpose.
    z = zph.reshape(N, 2, 2, C2, H, W)
    z = jnp.transpose(z, (0, 3, 4, 1, 5, 2)).reshape(N, C2, 2 * H, 2 * W)
    return z[:, :, :Hout, :Wout]


def _reference_forward(x_nchw, w_deconv, b_deconv, w_conv, b_conv, output_size):
    """Independent XLA reference (lax.conv_general_dilated)."""
    H, W = x_nchw.shape[2], x_nchw.shape[3]
    op_h = output_size[0] - (2 * H - 1)
    op_w = output_size[1] - (2 * W - 1)
    w_eq = jnp.flip(w_deconv, axis=(2, 3)).transpose(1, 0, 2, 3)  # OIHW
    y = jax.lax.conv_general_dilated(
        x_nchw, w_eq, window_strides=(1, 1),
        padding=[(1, 1 + op_h), (1, 1 + op_w)], lhs_dilation=(2, 2),
        dimension_numbers=("NCHW", "OIHW", "NCHW"))
    y = jax.nn.relu(y + b_deconv[None, :, None, None])
    z = jax.lax.conv_general_dilated(
        y, w_conv, window_strides=(1, 1), padding=[(1, 1), (1, 1)],
        dimension_numbers=("NCHW", "OIHW", "NCHW"))
    z = jax.nn.relu(z + b_conv[None, :, None, None])
    return z


if __name__ == "__main__":
    N, C, H, W = 2, 4, 16, 16
    k = 3

    key = jax.random.PRNGKey(0)
    k1, k2, k3, k4, k5 = jax.random.split(key, 5)
    x = jax.random.normal(k1, (N, C, H, W), jnp.float32)
    w_deconv = 0.1 * jax.random.normal(k2, (C, C, k, k), jnp.float32)     # (in, out, kh, kw)
    b_deconv = 0.1 * jax.random.normal(k3, (C,), jnp.float32)
    w_conv = 0.1 * jax.random.normal(k4, (C // 2, C, k, k), jnp.float32)  # (out, in, kh, kw)
    b_conv = 0.1 * jax.random.normal(k5, (C // 2,), jnp.float32)

    # Even output size (output_padding=1) and odd (output_padding=0) to cover
    # both boundary-mask paths.
    for output_size in ((2 * H, 2 * W), (2 * H - 1, 2 * W - 1)):
        out = upsample_forward(x, w_deconv, b_deconv, w_conv, b_conv,
                               output_size)
        out = jax.block_until_ready(out)
        ref = _reference_forward(x, w_deconv, b_deconv, w_conv, b_conv,
                                 output_size)
        assert out.shape == (N, C // 2, output_size[0], output_size[1]), \
            out.shape
        max_err = float(jnp.abs(out - ref).max())
        assert jnp.allclose(out, ref, atol=1e-4, rtol=1e-4), \
            (output_size, max_err)

    print("KERNEL_OK")
</pallas_src>

<mosaic_0001>
module attributes {stable_mosaic.version = 11 : i64} {
  func.func @_upsample_fused_kernel(%arg0: i32, %arg1: memref<1x4x256xf32, #tpu.memory_space<vmem>>, %arg2: memref<4x16x4xf32, #tpu.memory_space<vmem>>, %arg3: memref<16x1xf32, #tpu.memory_space<vmem>>, %arg4: memref<16x8x4xf32, #tpu.memory_space<vmem>>, %arg5: memref<8x1xf32, #tpu.memory_space<vmem>>, %arg6: memref<4x256xf32, #tpu.memory_space<vmem>>, %arg7: memref<1x8x256xf32, #tpu.memory_space<vmem>>) attributes {dimension_semantics = [#tpu.dimension_semantics<parallel>], iteration_bounds = array<i64: 2>, scalar_prefetch = 0 : i64, scratch_operands = 0 : i64, tpu.core_type = #tpu.core_type<tc>, window_params = [{transform_indices = @transform_0, window_bounds = array<i64: 1, 4, 256>}, {pipeline_mode = #tpu.pipeline_mode<synchronous>, transform_indices = @transform_1, window_bounds = array<i64: 4, 16, 4>}, {pipeline_mode = #tpu.pipeline_mode<synchronous>, transform_indices = @transform_2, window_bounds = array<i64: 16, 1>}, {pipeline_mode = #tpu.pipeline_mode<synchronous>, transform_indices = @transform_3, window_bounds = array<i64: 16, 8, 4>}, {pipeline_mode = #tpu.pipeline_mode<synchronous>, transform_indices = @transform_4, window_bounds = array<i64: 8, 1>}, {pipeline_mode = #tpu.pipeline_mode<synchronous>, transform_indices = @transform_5, window_bounds = array<i64: 4, 256>}, {transform_indices = @transform_6, window_bounds = array<i64: 1, 8, 256>}]} {
    %c0 = arith.constant 0 : index
    %c0_0 = arith.constant 0 : index
    %0 = vector.load %arg6[%c0, %c0_0] : memref<4x256xf32, #tpu.memory_space<vmem>>, vector<1x256xf32>
    %c1 = arith.constant 1 : index
    %c0_1 = arith.constant 0 : index
    %1 = vector.load %arg6[%c1, %c0_1] : memref<4x256xf32, #tpu.memory_space<vmem>>, vector<1x256xf32>
    %c2 = arith.constant 2 : index
    %c0_2 = arith.constant 0 : index
    %2 = vector.load %arg6[%c2, %c0_2] : memref<4x256xf32, #tpu.memory_space<vmem>>, vector<1x256xf32>
    %c3 = arith.constant 3 : index
    %c0_3 = arith.constant 0 : index
    %3 = vector.load %arg6[%c3, %c0_3] : memref<4x256xf32, #tpu.memory_space<vmem>>, vector<1x256xf32>
    %c0_4 = arith.constant 0 : index
    %c0_5 = arith.constant 0 : index
    %c0_6 = arith.constant 0 : index
    %4 = vector.load %arg1[%c0_4, %c0_5, %c0_6] : memref<1x4x256xf32, #tpu.memory_space<vmem>>, vector<1x4x256xf32>
    %5 = vector.shape_cast %4 : vector<1x4x256xf32> to vector<4x256xf32>
    %c255_i32 = arith.constant 255 : i32
    %6 = tpu.dynamic_rotate %5 by %c255_i32 dim 1 : vector<4x256xf32>, i32 -> vector<4x256xf32>
    %7 = vector.broadcast %3 : vector<1x256xf32> to vector<4x256xf32>
    %8 = arith.mulf %6, %7 : vector<4x256xf32>
    %c240_i32 = arith.constant 240 : i32
    %9 = tpu.dynamic_rotate %5 by %c240_i32 dim 1 : vector<4x256xf32>, i32 -> vector<4x256xf32>
    %10 = vector.broadcast %1 : vector<1x256xf32> to vector<4x256xf32>
    %11 = arith.mulf %9, %10 : vector<4x256xf32>
    %c239_i32 = arith.constant 239 : i32
    %12 = tpu.dynamic_rotate %5 by %c239_i32 dim 1 : vector<4x256xf32>, i32 -> vector<4x256xf32>
    %13 = arith.mulf %1, %3 : vector<1x256xf32>
    %14 = vector.broadcast %13 : vector<1x256xf32> to vector<4x256xf32>
    %15 = arith.mulf %12, %14 : vector<4x256xf32>
    %c0_7 = arith.constant 0 : index
    %c0_8 = arith.constant 0 : index
    %c0_9 = arith.constant 0 : index
    %16 = vector.load %arg2[%c0_7, %c0_8, %c0_9] : memref<4x16x4xf32, #tpu.memory_space<vmem>>, vector<1x16x4xf32>
    %17 = vector.shape_cast %16 : vector<1x16x4xf32> to vector<16x4xf32>
    %cst = arith.constant dense<0.000000e+00> : vector<16x256xf32>
    %18 = tpu.matmul %17, %5, %cst {dimension_numbers = #tpu.dot_dimension_numbers<[1], [0], [0], [1], [0, 0, 1, 1], [], []>} : vector<16x4xf32>, vector<4x256xf32>, vector<16x256xf32> -> vector<16x256xf32>
    %c1_10 = arith.constant 1 : index
    %c0_11 = arith.constant 0 : index
    %c0_12 = arith.constant 0 : index
    %19 = vector.load %arg2[%c1_10, %c0_11, %c0_12] : memref<4x16x4xf32, #tpu.memory_space<vmem>>, vector<1x16x4xf32>
    %20 = vector.shape_cast %19 : vector<1x16x4xf32> to vector<16x4xf32>
    %cst_13 = arith.constant dense<0.000000e+00> : vector<16x256xf32>
    %21 = tpu.matmul %20, %8, %cst_13 {dimension_numbers = #tpu.dot_dimension_numbers<[1], [0], [0], [1], [0, 0, 1, 1], [], []>} : vector<16x4xf32>, vector<4x256xf32>, vector<16x256xf32> -> vector<16x256xf32>
    %22 = arith.addf %18, %21 : vector<16x256xf32>
    %c2_14 = arith.constant 2 : index
    %c0_15 = arith.constant 0 : index
    %c0_16 = arith.constant 0 : index
    %23 = vector.load %arg2[%c2_14, %c0_15, %c0_16] : memref<4x16x4xf32, #tpu.memory_space<vmem>>, vector<1x16x4xf32>
    %24 = vector.shape_cast %23 : vector<1x16x4xf32> to vector<16x4xf32>
    %cst_17 = arith.constant dense<0.000000e+00> : vector<16x256xf32>
    %25 = tpu.matmul %24, %11, %cst_17 {dimension_numbers = #tpu.dot_dimension_numbers<[1], [0], [0], [1], [0, 0, 1, 1], [], []>} : vector<16x4xf32>, vector<4x256xf32>, vector<16x256xf32> -> vector<16x256xf32>
    %26 = arith.addf %22, %25 : vector<16x256xf32>
    %c3_18 = arith.constant 3 : index
    %c0_19 = arith.constant 0 : index
    %c0_20 = arith.constant 0 : index
    %27 = vector.load %arg2[%c3_18, %c0_19, %c0_20] : memref<4x16x4xf32, #tpu.memory_space<vmem>>, vector<1x16x4xf32>
    %28 = vector.shape_cast %27 : vector<1x16x4xf32> to vector<16x4xf32>
    %cst_21 = arith.constant dense<0.000000e+00> : vector<16x256xf32>
    %29 = tpu.matmul %28, %15, %cst_21 {dimension_numbers = #tpu.dot_dimension_numbers<[1], [0], [0], [1], [0, 0, 1, 1], [], []>} : vector<16x4xf32>, vector<4x256xf32>, vector<16x256xf32> -> vector<16x256xf32>
    %30 = arith.addf %26, %29 : vector<16x256xf32>
    %c0_22 = arith.constant 0 : index
    %c0_23 = arith.constant 0 : index
    %31 = vector.load %arg3[%c0_22, %c0_23] : memref<16x1xf32, #tpu.memory_space<vmem>>, vector<16x1xf32>
    %32 = vector.broadcast %31 : vector<16x1xf32> to vector<16x256xf32>
    %33 = arith.addf %30, %32 : vector<16x256xf32>
    %cst_24 = arith.constant 0.000000e+00 : f32
    %34 = vector.broadcast %cst_24 : f32 to vector<16x256xf32>
    %35 = arith.maximumf %33, %34 : vector<16x256xf32>
    %36 = vector.extract_strided_slice %35 {offsets = [12, 0], sizes = [4, 256], strides = [1, 1]} : vector<16x256xf32> to vector<4x256xf32>
    %c17_i32 = arith.constant 17 : i32
    %37 = tpu.dynamic_rotate %36 by %c17_i32 dim 1 : vector<4x256xf32>, i32 -> vector<4x256xf32>
    %38 = arith.mulf %0, %2 : vector<1x256xf32>
    %39 = vector.broadcast %38 : vector<1x256xf32> to vector<4x256xf32>
    %40 = arith.mulf %37, %39 : vector<4x256xf32>
    %c0_25 = arith.constant 0 : index
    %c0_26 = arith.constant 0 : index
    %c0_27 = arith.constant 0 : index
    %41 = vector.load %arg4[%c0_25, %c0_26, %c0_27] : memref<16x8x4xf32, #tpu.memory_space<vmem>>, vector<1x8x4xf32>
    %42 = vector.shape_cast %41 : vector<1x8x4xf32> to vector<8x4xf32>
    %cst_28 = arith.constant dense<0.000000e+00> : vector<8x256xf32>
    %43 = tpu.matmul %42, %40, %cst_28 {dimension_numbers = #tpu.dot_dimension_numbers<[1], [0], [0], [1], [0, 0, 1, 1], [], []>} : vector<8x4xf32>, vector<4x256xf32>, vector<8x256xf32> -> vector<8x256xf32>
    %44 = vector.extract_strided_slice %35 {offsets = [8, 0], sizes = [4, 256], strides = [1, 1]} : vector<16x256xf32> to vector<4x256xf32>
    %c16_i32 = arith.constant 16 : i32
    %45 = tpu.dynamic_rotate %44 by %c16_i32 dim 1 : vector<4x256xf32>, i32 -> vector<4x256xf32>
    %46 = vector.broadcast %0 : vector<1x256xf32> to vector<4x256xf32>
    %47 = arith.mulf %45, %46 : vector<4x256xf32>
    %c1_29 = arith.constant 1 : index
    %c0_30 = arith.constant 0 : index
    %c0_31 = arith.constant 0 : index
    %48 = vector.load %arg4[%c1_29, %c0_30, %c0_31] : memref<16x8x4xf32, #tpu.memory_space<vmem>>, vector<1x8x4xf32>
    %49 = vector.shape_cast %48 : vector<1x8x4xf32> to vector<8x4xf32>
    %cst_32 = arith.constant dense<0.000000e+00> : vector<8x256xf32>
    %50 = tpu.matmul %49, %47, %cst_32 {dimension_numbers = #tpu.dot_dimension_numbers<[1], [0], [0], [1], [0, 0, 1, 1], [], []>} : vector<8x4xf32>, vector<4x256xf32>, vector<8x256xf32> -> vector<8x256xf32>
    %51 = arith.addf %43, %50 : vector<8x256xf32>
    %52 = vector.extract_strided_slice %35 {offsets = [12, 0], sizes = [4, 256], strides = [1, 1]} : vector<16x256xf32> to vector<4x256xf32>
    %c16_i32_33 = arith.constant 16 : i32
    %53 = tpu.dynamic_rotate %52 by %c16_i32_33 dim 1 : vector<4x256xf32>, i32 -> vector<4x256xf32>
    %54 = vector.broadcast %0 : vector<1x256xf32> to vector<4x256xf32>
    %55 = arith.mulf %53, %54 : vector<4x256xf32>
    %c2_34 = arith.constant 2 : index
    %c0_35 = arith.constant 0 : index
    %c0_36 = arith.constant 0 : index
    %56 = vector.load %arg4[%c2_34, %c0_35, %c0_36] : memref<16x8x4xf32, #tpu.memory_space<vmem>>, vector<1x8x4xf32>
    %57 = vector.shape_cast %56 : vector<1x8x4xf32> to vector<8x4xf32>
    %cst_37 = arith.constant dense<0.000000e+00> : vector<8x256xf32>
    %58 = tpu.matmul %57, %55, %cst_37 {dimension_numbers = #tpu.dot_dimension_numbers<[1], [0], [0], [1], [0, 0, 1, 1], [], []>} : vector<8x4xf32>, vector<4x256xf32>, vector<8x256xf32> -> vector<8x256xf32>
    %59 = arith.addf %51, %58 : vector<8x256xf32>
    %60 = vector.extract_strided_slice %35 {offsets = [8, 0], sizes = [4, 256], strides = [1, 1]} : vector<16x256xf32> to vector<4x256xf32>
    %c15_i32 = arith.constant 15 : i32
    %61 = tpu.dynamic_rotate %60 by %c15_i32 dim 1 : vector<4x256xf32>, i32 -> vector<4x256xf32>
    %62 = arith.mulf %0, %3 : vector<1x256xf32>
    %63 = vector.broadcast %62 : vector<1x256xf32> to vector<4x256xf32>
    %64 = arith.mulf %61, %63 : vector<4x256xf32>
    %c3_38 = arith.constant 3 : index
    %c0_39 = arith.constant 0 : index
    %c0_40 = arith.constant 0 : index
    %65 = vector.load %arg4[%c3_38, %c0_39, %c0_40] : memref<16x8x4xf32, #tpu.memory_space<vmem>>, vector<1x8x4xf32>
    %66 = vector.shape_cast %65 : vector<1x8x4xf32> to vector<8x4xf32>
    %cst_41 = arith.constant dense<0.000000e+00> : vector<8x256xf32>
    %67 = tpu.matmul %66, %64, %cst_41 {dimension_numbers = #tpu.dot_dimension_numbers<[1], [0], [0], [1], [0, 0, 1, 1], [], []>} : vector<8x4xf32>, vector<4x256xf32>, vector<8x256xf32> -> vector<8x256xf32>
    %68 = arith.addf %59, %67 : vector<8x256xf32>
    %69 = vector.extract_strided_slice %35 {offsets = [4, 0], sizes = [4, 256], strides = [1, 1]} : vector<16x256xf32> to vector<4x256xf32>
    %c1_i32 = arith.constant 1 : i32
    %70 = tpu.dynamic_rotate %69 by %c1_i32 dim 1 : vector<4x256xf32>, i32 -> vector<4x256xf32>
    %71 = vector.broadcast %2 : vector<1x256xf32> to vector<4x256xf32>
    %72 = arith.mulf %70, %71 : vector<4x256xf32>
    %c4 = arith.constant 4 : index
    %c0_42 = arith.constant 0 : index
    %c0_43 = arith.constant 0 : index
    %73 = vector.load %arg4[%c4, %c0_42, %c0_43] : memref<16x8x4xf32, #tpu.memory_space<vmem>>, vector<1x8x4xf32>
    %74 = vector.shape_cast %73 : vector<1x8x4xf32> to vector<8x4xf32>
    %cst_44 = arith.constant dense<0.000000e+00> : vector<8x256xf32>
    %75 = tpu.matmul %74, %72, %cst_44 {dimension_numbers = #tpu.dot_dimension_numbers<[1], [0], [0], [1], [0, 0, 1, 1], [], []>} : vector<8x4xf32>, vector<4x256xf32>, vector<8x256xf32> -> vector<8x256xf32>
    %76 = arith.addf %68, %75 : vector<8x256xf32>
    %77 = vector.extract_strided_slice %35 {offsets = [0, 0], sizes = [4, 256], strides = [1, 1]} : vector<16x256xf32> to vector<4x256xf32>
    %c5 = arith.constant 5 : index
    %c0_45 = arith.constant 0 : index
    %c0_46 = arith.constant 0 : index
    %78 = vector.load %arg4[%c5, %c0_45, %c0_46] : memref<16x8x4xf32, #tpu.memory_space<vmem>>, vector<1x8x4xf32>
    %79 = vector.shape_cast %78 : vector<1x8x4xf32> to vector<8x4xf32>
    %cst_47 = arith.constant dense<0.000000e+00> : vector<8x256xf32>
    %80 = tpu.matmul %79, %77, %cst_47 {dimension_numbers = #tpu.dot_dimension_numbers<[1], [0], [0], [1], [0, 0, 1, 1], [], []>} : vector<8x4xf32>, vector<4x256xf32>, vector<8x256xf32> -> vector<8x256xf32>
    %81 = arith.addf %76, %80 : vector<8x256xf32>
    %82 = vector.extract_strided_slice %35 {offsets = [4, 0], sizes = [4, 256], strides = [1, 1]} : vector<16x256xf32> to vector<4x256xf32>
    %c6 = arith.constant 6 : index
    %c0_48 = arith.constant 0 : index
    %c0_49 = arith.constant 0 : index
    %83 = vector.load %arg4[%c6, %c0_48, %c0_49] : memref<16x8x4xf32, #tpu.memory_space<vmem>>, vector<1x8x4xf32>
    %84 = vector.shape_cast %83 : vector<1x8x4xf32> to vector<8x4xf32>
    %cst_50 = arith.constant dense<0.000000e+00> : vector<8x256xf32>
    %85 = tpu.matmul %84, %82, %cst_50 {dimension_numbers = #tpu.dot_dimension_numbers<[1], [0], [0], [1], [0, 0, 1, 1], [], []>} : vector<8x4xf32>, vector<4x256xf32>, vector<8x256xf32> -> vector<8x256xf32>
    %86 = arith.addf %81, %85 : vector<8x256xf32>
    %87 = vector.extract_strided_slice %35 {offsets = [0, 0], sizes = [4, 256], strides = [1, 1]} : vector<16x256xf32> to vector<4x256xf32>
    %c255_i32_51 = arith.constant 255 : i32
    %88 = tpu.dynamic_rotate %87 by %c255_i32_51 dim 1 : vector<4x256xf32>, i32 -> vector<4x256xf32>
    %89 = vector.broadcast %3 : vector<1x256xf32> to vector<4x256xf32>
    %90 = arith.mulf %88, %89 : vector<4x256xf32>
    %c7 = arith.constant 7 : index
    %c0_52 = arith.constant 0 : index
    %c0_53 = arith.constant 0 : index
    %91 = vector.load %arg4[%c7, %c0_52, %c0_53] : memref<16x8x4xf32, #tpu.memory_space<vmem>>, vector<1x8x4xf32>
    %92 = vector.shape_cast %91 : vector<1x8x4xf32> to vector<8x4xf32>
    %cst_54 = arith.constant dense<0.000000e+00> : vector<8x256xf32>
    %93 = tpu.matmul %92, %90, %cst_54 {dimension_numbers = #tpu.dot_dimension_numbers<[1], [0], [0], [1], [0, 0, 1, 1], [], []>} : vector<8x4xf32>, vector<4x256xf32>, vector<8x256xf32> -> vector<8x256xf32>
    %94 = arith.addf %86, %93 : vector<8x256xf32>
    %95 = vector.extract_strided_slice %35 {offsets = [12, 0], sizes = [4, 256], strides = [1, 1]} : vector<16x256xf32> to vector<4x256xf32>
    %c1_i32_55 = arith.constant 1 : i32
    %96 = tpu.dynamic_rotate %95 by %c1_i32_55 dim 1 : vector<4x256xf32>, i32 -> vector<4x256xf32>
    %97 = vector.broadcast %2 : vector<1x256xf32> to vector<4x256xf32>
    %98 = arith.mulf %96, %97 : vector<4x256xf32>
    %c8 = arith.constant 8 : index
    %c0_56 = arith.constant 0 : index
    %c0_57 = arith.constant 0 : index
    %99 = vector.load %arg4[%c8, %c0_56, %c0_57] : memref<16x8x4xf32, #tpu.memory_space<vmem>>, vector<1x8x4xf32>
    %100 = vector.shape_cast %99 : vector<1x8x4xf32> to vector<8x4xf32>
    %cst_58 = arith.constant dense<0.000000e+00> : vector<8x256xf32>
    %101 = tpu.matmul %100, %98, %cst_58 {dimension_numbers = #tpu.dot_dimension_numbers<[1], [0], [0], [1], [0, 0, 1, 1], [], []>} : vector<8x4xf32>, vector<4x256xf32>, vector<8x256xf32> -> vector<8x256xf32>
    %102 = arith.addf %94, %101 : vector<8x256xf32>
    %103 = vector.extract_strided_slice %35 {offsets = [8, 0], sizes = [4, 256], strides = [1, 1]} : vector<16x256xf32> to vector<4x256xf32>
    %c9 = arith.constant 9 : index
    %c0_59 = arith.constant 0 : index
    %c0_60 = arith.constant 0 : index
    %104 = vector.load %arg4[%c9, %c0_59, %c0_60] : memref<16x8x4xf32, #tpu.memory_space<vmem>>, vector<1x8x4xf32>
    %105 = vector.shape_cast %104 : vector<1x8x4xf32> to vector<8x4xf32>
    %cst_61 = arith.constant dense<0.000000e+00> : vector<8x256xf32>
    %106 = tpu.matmul %105, %103, %cst_61 {dimension_numbers = #tpu.dot_dimension_numbers<[1], [0], [0], [1], [0, 0, 1, 1], [], []>} : vector<8x4xf32>, vector<4x256xf32>, vector<8x256xf32> -> vector<8x256xf32>
    %107 = arith.addf %102, %106 : vector<8x256xf32>
    %108 = vector.extract_strided_slice %35 {offsets = [12, 0], sizes = [4, 256], strides = [1, 1]} : vector<16x256xf32> to vector<4x256xf32>
    %c10 = arith.constant 10 : index
    %c0_62 = arith.constant 0 : index
    %c0_63 = arith.constant 0 : index
    %109 = vector.load %arg4[%c10, %c0_62, %c0_63] : memref<16x8x4xf32, #tpu.memory_space<vmem>>, vector<1x8x4xf32>
    %110 = vector.shape_cast %109 : vector<1x8x4xf32> to vector<8x4xf32>
    %cst_64 = arith.constant dense<0.000000e+00> : vector<8x256xf32>
    %111 = tpu.matmul %110, %108, %cst_64 {dimension_numbers = #tpu.dot_dimension_numbers<[1], [0], [0], [1], [0, 0, 1, 1], [], []>} : vector<8x4xf32>, vector<4x256xf32>, vector<8x256xf32> -> vector<8x256xf32>
    %112 = arith.addf %107, %111 : vector<8x256xf32>
    %113 = vector.extract_strided_slice %35 {offsets = [8, 0], sizes = [4, 256], strides = [1, 1]} : vector<16x256xf32> to vector<4x256xf32>
    %c255_i32_65 = arith.constant 255 : i32
    %114 = tpu.dynamic_rotate %113 by %c255_i32_65 dim 1 : vector<4x256xf32>, i32 -> vector<4x256xf32>
    %115 = vector.broadcast %3 : vector<1x256xf32> to vector<4x256xf32>
    %116 = arith.mulf %114, %115 : vector<4x256xf32>
    %c11 = arith.constant 11 : index
    %c0_66 = arith.constant 0 : index
    %c0_67 = arith.constant 0 : index
    %117 = vector.load %arg4[%c11, %c0_66, %c0_67] : memref<16x8x4xf32, #tpu.memory_space<vmem>>, vector<1x8x4xf32>
    %118 = vector.shape_cast %117 : vector<1x8x4xf32> to vector<8x4xf32>
    %cst_68 = arith.constant dense<0.000000e+00> : vector<8x256xf32>
    %119 = tpu.matmul %118, %116, %cst_68 {dimension_numbers = #tpu.dot_dimension_numbers<[1], [0], [0], [1], [0, 0, 1, 1], [], []>} : vector<8x4xf32>, vector<4x256xf32>, vector<8x256xf32> -> vector<8x256xf32>
    %120 = arith.addf %112, %119 : vector<8x256xf32>
    %121 = vector.extract_strided_slice %35 {offsets = [4, 0], sizes = [4, 256], strides = [1, 1]} : vector<16x256xf32> to vector<4x256xf32>
    %c241_i32 = arith.constant 241 : i32
    %122 = tpu.dynamic_rotate %121 by %c241_i32 dim 1 : vector<4x256xf32>, i32 -> vector<4x256xf32>
    %123 = arith.mulf %1, %2 : vector<1x256xf32>
    %124 = vector.broadcast %123 : vector<1x256xf32> to vector<4x256xf32>
    %125 = arith.mulf %122, %124 : vector<4x256xf32>
    %c12 = arith.constant 12 : index
    %c0_69 = arith.constant 0 : index
    %c0_70 = arith.constant 0 : index
    %126 = vector.load %arg4[%c12, %c0_69, %c0_70] : memref<16x8x4xf32, #tpu.memory_space<vmem>>, vector<1x8x4xf32>
    %127 = vector.shape_cast %126 : vector<1x8x4xf32> to vector<8x4xf32>
    %cst_71 = arith.constant dense<0.000000e+00> : vector<8x256xf32>
    %128 = tpu.matmul %127, %125, %cst_71 {dimension_numbers = #tpu.dot_dimension_numbers<[1], [0], [0], [1], [0, 0, 1, 1], [], []>} : vector<8x4xf32>, vector<4x256xf32>, vector<8x256xf32> -> vector<8x256xf32>
    %129 = arith.addf %120, %128 : vector<8x256xf32>
    %130 = vector.extract_strided_slice %35 {offsets = [0, 0], sizes = [4, 256], strides = [1, 1]} : vector<16x256xf32> to vector<4x256xf32>
    %c240_i32_72 = arith.constant 240 : i32
    %131 = tpu.dynamic_rotate %130 by %c240_i32_72 dim 1 : vector<4x256xf32>, i32 -> vector<4x256xf32>
    %132 = vector.broadcast %1 : vector<1x256xf32> to vector<4x256xf32>
    %133 = arith.mulf %131, %132 : vector<4x256xf32>
    %c13 = arith.constant 13 : index
    %c0_73 = arith.constant 0 : index
    %c0_74 = arith.constant 0 : index
    %134 = vector.load %arg4[%c13, %c0_73, %c0_74] : memref<16x8x4xf32, #tpu.memory_space<vmem>>, vector<1x8x4xf32>
    %135 = vector.shape_cast %134 : vector<1x8x4xf32> to vector<8x4xf32>
    %cst_75 = arith.constant dense<0.000000e+00> : vector<8x256xf32>
    %136 = tpu.matmul %135, %133, %cst_75 {dimension_numbers = #tpu.dot_dimension_numbers<[1], [0], [0], [1], [0, 0, 1, 1], [], []>} : vector<8x4xf32>, vector<4x256xf32>, vector<8x256xf32> -> vector<8x256xf32>
    %137 = arith.addf %129, %136 : vector<8x256xf32>
    %138 = vector.extract_strided_slice %35 {offsets = [4, 0], sizes = [4, 256], strides = [1, 1]} : vector<16x256xf32> to vector<4x256xf32>
    %c240_i32_76 = arith.constant 240 : i32
    %139 = tpu.dynamic_rotate %138 by %c240_i32_76 dim 1 : vector<4x256xf32>, i32 -> vector<4x256xf32>
    %140 = vector.broadcast %1 : vector<1x256xf32> to vector<4x256xf32>
    %141 = arith.mulf %139, %140 : vector<4x256xf32>
    %c14 = arith.constant 14 : index
    %c0_77 = arith.constant 0 : index
    %c0_78 = arith.constant 0 : index
    %142 = vector.load %arg4[%c14, %c0_77, %c0_78] : memref<16x8x4xf32, #tpu.memory_space<vmem>>, vector<1x8x4xf32>
    %143 = vector.shape_cast %142 : vector<1x8x4xf32> to vector<8x4xf32>
    %cst_79 = arith.constant dense<0.000000e+00> : vector<8x256xf32>
    %144 = tpu.matmul %143, %141, %cst_79 {dimension_numbers = #tpu.dot_dimension_numbers<[1], [0], [0], [1], [0, 0, 1, 1], [], []>} : vector<8x4xf32>, vector<4x256xf32>, vector<8x256xf32> -> vector<8x256xf32>
    %145 = arith.addf %137, %144 : vector<8x256xf32>
    %146 = vector.extract_strided_slice %35 {offsets = [0, 0], sizes = [4, 256], strides = [1, 1]} : vector<16x256xf32> to vector<4x256xf32>
    %c239_i32_80 = arith.constant 239 : i32
    %147 = tpu.dynamic_rotate %146 by %c239_i32_80 dim 1 : vector<4x256xf32>, i32 -> vector<4x256xf32>
    %148 = arith.mulf %1, %3 : vector<1x256xf32>
    %149 = vector.broadcast %148 : vector<1x256xf32> to vector<4x256xf32>
    %150 = arith.mulf %147, %149 : vector<4x256xf32>
    %c15 = arith.constant 15 : index
    %c0_81 = arith.constant 0 : index
    %c0_82 = arith.constant 0 : index
    %151 = vector.load %arg4[%c15, %c0_81, %c0_82] : memref<16x8x4xf32, #tpu.memory_space<vmem>>, vector<1x8x4xf32>
    %152 = vector.shape_cast %151 : vector<1x8x4xf32> to vector<8x4xf32>
    %cst_83 = arith.constant dense<0.000000e+00> : vector<8x256xf32>
    %153 = tpu.matmul %152, %150, %cst_83 {dimension_numbers = #tpu.dot_dimension_numbers<[1], [0], [0], [1], [0, 0, 1, 1], [], []>} : vector<8x4xf32>, vector<4x256xf32>, vector<8x256xf32> -> vector<8x256xf32>
    %154 = arith.addf %145, %153 : vector<8x256xf32>
    %c0_84 = arith.constant 0 : index
    %c0_85 = arith.constant 0 : index
    %155 = vector.load %arg5[%c0_84, %c0_85] : memref<8x1xf32, #tpu.memory_space<vmem>>, vector<8x1xf32>
    %156 = vector.broadcast %155 : vector<8x1xf32> to vector<8x256xf32>
    %157 = arith.addf %154, %156 : vector<8x256xf32>
    %cst_86 = arith.constant 0.000000e+00 : f32
    %158 = vector.broadcast %cst_86 : f32 to vector<8x256xf32>
    %159 = arith.maximumf %157, %158 : vector<8x256xf32>
    %c0_87 = arith.constant 0 : index
    %c0_88 = arith.constant 0 : index
    %c0_89 = arith.constant 0 : index
    %160 = vector.load %arg7[%c0_87, %c0_88, %c0_89] : memref<1x8x256xf32, #tpu.memory_space<vmem>>, vector<1x8x256xf32>
    %161 = vector.shape_cast %160 : vector<1x8x256xf32> to vector<8x256xf32>
    %162 = vector.shape_cast %159 : vector<8x256xf32> to vector<1x8x256xf32>
    tpu.vector_store %arg7[%c0_87, %c0_88, %c0_89], %162 {strides = array<i32>} : memref<1x8x256xf32, #tpu.memory_space<vmem>>, vector<1x8x256xf32>,
    return
  }
  func.func @transform_0(%arg0: i32) -> (i32, i32, i32) {
    %c0_i32 = arith.constant 0 : i32
    %c0_i32_0 = arith.constant 0 : i32
    %c0_i32_1 = arith.constant 0 : i32
    return %arg0, %c0_i32, %c0_i32_0 : i32, i32, i32
  }
  func.func @transform_1(%arg0: i32) -> (i32, i32, i32) {
    %c0_i32 = arith.constant 0 : i32
    %c0_i32_0 = arith.constant 0 : i32
    %c0_i32_1 = arith.constant 0 : i32
    %c0_i32_2 = arith.constant 0 : i32
    return %c0_i32, %c0_i32_0, %c0_i32_1 : i32, i32, i32
  }
  func.func @transform_2(%arg0: i32) -> (i32, i32) {
    %c0_i32 = arith.constant 0 : i32
    %c0_i32_0 = arith.constant 0 : i32
    %c0_i32_1 = arith.constant 0 : i32
    return %c0_i32, %c0_i32_0 : i32, i32
  }
  func.func @transform_3(%arg0: i32) -> (i32, i32, i32) {
    %c0_i32 = arith.constant 0 : i32
    %c0_i32_0 = arith.constant 0 : i32
    %c0_i32_1 = arith.constant 0 : i32
    %c0_i32_2 = arith.constant 0 : i32
    return %c0_i32, %c0_i32_0, %c0_i32_1 : i32, i32, i32
  }
  func.func @transform_4(%arg0: i32) -> (i32, i32) {
    %c0_i32 = arith.constant 0 : i32
    %c0_i32_0 = arith.constant 0 : i32
    %c0_i32_1 = arith.constant 0 : i32
    return %c0_i32, %c0_i32_0 : i32, i32
  }
  func.func @transform_5(%arg0: i32) -> (i32, i32) {
    %c0_i32 = arith.constant 0 : i32
    %c0_i32_0 = arith.constant 0 : i32
    %c0_i32_1 = arith.constant 0 : i32
    return %c0_i32, %c0_i32_0 : i32, i32
  }
  func.func @transform_6(%arg0: i32) -> (i32, i32, i32) {
    %c0_i32 = arith.constant 0 : i32
    %c0_i32_0 = arith.constant 0 : i32
    %c0_i32_1 = arith.constant 0 : i32
    return %arg0, %c0_i32, %c0_i32_0 : i32, i32, i32
  }
}

</mosaic_0001>

<llo_original>
// kernel: tpu_custom_call.1
$region0: #{tpu_custom_call.1}
  #allocation0 [shape = 'u32[]', space=smem, size = 0x4, offset = 0x4, fixed_abs, tag = 'smem constant byte address 0x4 - core index']
  #allocation1 [shape = 'u32[144,128]{1,0:T(1,128)}', space=vmem, size = 0x12000, scoped, tag = 'internal scratch']
  %s0 = inlined_call_operand.vmem [shape: f32[2,4,256], index: 0, kind: input, shape index: {}]
  %s1 = inlined_call_operand.vmem [shape: f32[4,16,4], index: 1, kind: input, shape index: {}]
  %s2 = inlined_call_operand.vmem [shape: f32[16,1], index: 2, kind: input, shape index: {}]
  %s3 = inlined_call_operand.vmem [shape: f32[16,8,4], index: 3, kind: input, shape index: {}]
  %s4 = inlined_call_operand.vmem [shape: f32[8,1], index: 4, kind: input, shape index: {}]
  %s5 = inlined_call_operand.vmem [shape: f32[4,256], index: 5, kind: input, shape index: {}]
  %s6 = inlined_call_operand.hbm [shape: f32[2,8,256], index: 6, kind: output, shape index: {}]
  %s7 = sld [smem:[#allocation0]]
  $region57: #{tpu_custom_call.1} parent=0
    _
  %s9 = ssub.s32 1, %s7
  %s10 = scalar_select 0, %s9, %s7
  $region1: #{tpu_custom_call.1} parent=0
    #allocation2 [shape = 'u8[16384]{0}', space=vmem, size = 0x4000, scoped, tag = 'output window, operand 0']
    #allocation3 [shape = 's32[2]{0}', space=sflag, size = 0x8, scoped, tag = 'scoped memory for tpu_custom_call.1']
    %11 = vsyncpa [#allocation3], 0
    %s12 = scalar_lea.sflag [#allocation3], 1
    %13 = vsyncpa %s12, 0
    loop: start=0, step=1, limit=4
    $region2: #{tpu_custom_call.1} parent=1 // loop_pre_header
      _
    $region3: #{tpu_custom_call.1} parent=1 // loop_header
      %s15 = sphi 0, %s19
      %p16 = scmp.ge.s32.totalorder %s15, 4
      %s25 = sphi 0, %s27
      %s28 = sphi 0, %s25
      %s29 = sphi 0, %s28
      %s45 = sphi 0, %s29
      %s49 = sphi 0, %s49
      %s51 = sphi 0, %s49
      %s52 = sphi 0, %s51
      %s66 = sphi 0, %s52
      %s70 = sphi 0, %s70
      %s72 = sphi 0, %s70
      %s73 = sphi 0, %s72
      %s87 = sphi 0, %s73
      %s91 = sphi 0, %s91
      %s93 = sphi 0, %s91
      %s94 = sphi 0, %s93
      %s108 = sphi 0, %s94
      %s112 = sphi 0, %s112
      %s114 = sphi 0, %s112
      %s115 = sphi 0, %s114
      %s129 = sphi 0, %s115
      %s133 = sphi 0, %s133
      %s135 = sphi 0, %s133
      %s136 = sphi 0, %s135
      %s150 = sphi 0, %s136
      %s156 = sphi 0, %s158
      %s159 = sphi 0, %s156
      %s160 = sphi 0, %s159
      %s176 = sphi 0, %s160
    $region4: #{tpu_custom_call.1} parent=1 // loop_header_branch
      %18 = sbr.rel (%p16) target = $region8
    $region5: #{tpu_custom_call.1} parent=1 // loop_body
      %s20 = ssub.s32 %s15, 1
      %s21 = ssub.s32 %s15, 2
      %s22 = sadd.s32 %s15, 1
      %s23 = ssub.s32 %s15, %s22
      %p24 = scmp.eq.s32.totalorder %s23, 0
      %s26 = sadd.s32 %s25, 1
      %s27 = scalar_select %p24, %s25, %s26
      %p30 = pneg %p24
      %p31 = scmp.eq.s32.totalorder %s15, 1
      %p32 = por %p30, %p31
      %p33 = scmp.ne.s32.totalorder %s25, %s28
      %p34 = scmp.eq.s32.totalorder %s15, 0
      %p35 = por %p33, %p34
      %p36 = scmp.ne.s32.totalorder %s25, %s28
      %p37 = scmp.eq.s32.totalorder %s20, 1
      %p38 = por %p36, %p37
      %p39 = scmp.ne.s32.totalorder %s28, %s29
      %p40 = scmp.eq.s32.totalorder %s20, 0
      %p41 = por %p39, %p40
      %p42 = scmp.ne.s32.totalorder %s28, %s29
      %p43 = scmp.eq.s32.totalorder %s21, 1
      %p44 = por %p42, %p43
      %p46 = scmp.ne.s32.totalorder %s29, %s45
      %p47 = scmp.eq.s32.totalorder %s21, 0
      %p48 = por %p46, %p47
      %s50 = sadd.s32 %s49, 1
      %p53 = scmp.eq.s32.totalorder %s15, 1
      %p54 = scmp.ne.s32.totalorder %s49, %s51
      %p55 = scmp.eq.s32.totalorder %s15, 0
      %p56 = por %p54, %p55
      %p57 = scmp.ne.s32.totalorder %s49, %s51
      %p58 = scmp.eq.s32.totalorder %s20, 1
      %p59 = por %p57, %p58
      %p60 = scmp.ne.s32.totalorder %s51, %s52
      %p61 = scmp.eq.s32.totalorder %s20, 0
      %p62 = por %p60, %p61
      %p63 = scmp.ne.s32.totalorder %s51, %s52
      %p64 = scmp.eq.s32.totalorder %s21, 1
      %p65 = por %p63, %p64
      %p67 = scmp.ne.s32.totalorder %s52, %s66
      %p68 = scmp.eq.s32.totalorder %s21, 0
      %p69 = por %p67, %p68
      %s71 = sadd.s32 %s70, 1
      %p74 = scmp.eq.s32.totalorder %s15, 1
      %p75 = scmp.ne.s32.totalorder %s70, %s72
      %p76 = scmp.eq.s32.totalorder %s15, 0
      %p77 = por %p75, %p76
      %p78 = scmp.ne.s32.totalorder %s70, %s72
      %p79 = scmp.eq.s32.totalorder %s20, 1
      %p80 = por %p78, %p79
      %p81 = scmp.ne.s32.totalorder %s72, %s73
      %p82 = scmp.eq.s32.totalorder %s20, 0
      %p83 = por %p81, %p82
      %p84 = scmp.ne.s32.totalorder %s72, %s73
      %p85 = scmp.eq.s32.totalorder %s21, 1
      %p86 = por %p84, %p85
      %p88 = scmp.ne.s32.totalorder %s73, %s87
      %p89 = scmp.eq.s32.totalorder %s21, 0
      %p90 = por %p88, %p89
      %s92 = sadd.s32 %s91, 1
      %p95 = scmp.eq.s32.totalorder %s15, 1
      %p96 = scmp.ne.s32.totalorder %s91, %s93
      %p97 = scmp.eq.s32.totalorder %s15, 0
      %p98 = por %p96, %p97
      %p99 = scmp.ne.s32.totalorder %s91, %s93
      %p100 = scmp.eq.s32.totalorder %s20, 1
      %p101 = por %p99, %p100
      %p102 = scmp.ne.s32.totalorder %s93, %s94
      %p103 = scmp.eq.s32.totalorder %s20, 0
      %p104 = por %p102, %p103
      %p105 = scmp.ne.s32.totalorder %s93, %s94
      %p106 = scmp.eq.s32.totalorder %s21, 1
      %p107 = por %p105, %p106
      %p109 = scmp.ne.s32.totalorder %s94, %s108
      %p110 = scmp.eq.s32.totalorder %s21, 0
      %p111 = por %p109, %p110
      %s113 = sadd.s32 %s112, 1
      %p116 = scmp.eq.s32.totalorder %s15, 1
      %p117 = scmp.ne.s32.totalorder %s112, %s114
      %p118 = scmp.eq.s32.totalorder %s15, 0
      %p119 = por %p117, %p118
      %p120 = scmp.ne.s32.totalorder %s112, %s114
      %p121 = scmp.eq.s32.totalorder %s20, 1
      %p122 = por %p120, %p121
      %p123 = scmp.ne.s32.totalorder %s114, %s115
      %p124 = scmp.eq.s32.totalorder %s20, 0
      %p125 = por %p123, %p124
      %p126 = scmp.ne.s32.totalorder %s114, %s115
      %p127 = scmp.eq.s32.totalorder %s21, 1
      %p128 = por %p126, %p127
      %p130 = scmp.ne.s32.totalorder %s115, %s129
      %p131 = scmp.eq.s32.totalorder %s21, 0
      %p132 = por %p130, %p131
      %s134 = sadd.s32 %s133, 1
      %p137 = scmp.eq.s32.totalorder %s15, 1
      %p138 = scmp.ne.s32.totalorder %s133, %s135
      %p139 = scmp.eq.s32.totalorder %s15, 0
      %p140 = por %p138, %p139
      %p141 = scmp.ne.s32.totalorder %s133, %s135
      %p142 = scmp.eq.s32.totalorder %s20, 1
      %p143 = por %p141, %p142
      %p144 = scmp.ne.s32.totalorder %s135, %s136
      %p145 = scmp.eq.s32.totalorder %s20, 0
      %p146 = por %p144, %p145
      %p147 = scmp.ne.s32.totalorder %s135, %s136
      %p148 = scmp.eq.s32.totalorder %s21, 1
      %p149 = por %p147, %p148
      %p151 = scmp.ne.s32.totalorder %s136, %s150
      %p152 = scmp.eq.s32.totalorder %s21, 0
      %p153 = por %p151, %p152
      %s154 = ssub.s32 %s15, %s22
      %p155 = scmp.eq.s32.totalorder %s154, 0
      %s157 = sadd.s32 %s156, 1
      %s158 = scalar_select %p155, %s156, %s157
      %p161 = pneg %p155
      %p162 = scmp.eq.s32.totalorder %s15, 1
      %p163 = por %p161, %p162
      %p164 = scmp.ne.s32.totalorder %s156, %s159
      %p165 = scmp.eq.s32.totalorder %s15, 0
      %p166 = por %p164, %p165
      %p167 = scmp.ne.s32.totalorder %s156, %s159
      %p168 = scmp.eq.s32.totalorder %s20, 1
      %p169 = por %p167, %p168
      %p170 = scmp.ne.s32.totalorder %s159, %s160
      %p171 = scmp.eq.s32.totalorder %s20, 0
      %p172 = por %p170, %p171
      %p173 = scmp.ne.s32.totalorder %s159, %s160
      %p174 = scmp.eq.s32.totalorder %s21, 1
      %p175 = por %p173, %p174
      %p177 = scmp.ne.s32.totalorder %s160, %s176
      %p178 = scmp.eq.s32.totalorder %s21, 0
      %p179 = por %p177, %p178
      %p180 = scmp.le.s32.totalorder 1, %s15
      %p181 = scmp.lt.s32.totalorder %s15, 3
      %p182 = pnand %p180, %p181
      %p183 = pneg %p182
      // Predicated region
      $region9: #{tpu_custom_call.1} parent=5 // pred_check
        _
      $region10: #{tpu_custom_call.1} parent=5 // pred_check_branch
        %185 = sbr.rel (%p182) target = $region12
      $region11: #{tpu_custom_call.1} parent=5 // pred_region
        %s186 = ssub.s32 %s15, 1
        // Predicated region
        $region13: #{tpu_custom_call.1} parent=11 // pred_check
          %p187 = pneg %p62
        $region14: #{tpu_custom_call.1} parent=11 // pred_check_branch
          %189 = sbr.rel (%p187) target = $region16
        $region15: #{tpu_custom_call.1} parent=11 // pred_region
          _
        $region16: #{tpu_custom_call.1} parent=11 // pred_fallthru
          _
        // Predicated region
        $region17: #{tpu_custom_call.1} parent=11 // pred_check
          %p190 = pneg %p83
        $region18: #{tpu_custom_call.1} parent=11 // pred_check_branch
          %192 = sbr.rel (%p190) target = $region20
        $region19: #{tpu_custom_call.1} parent=11 // pred_region
          _
        $region20: #{tpu_custom_call.1} parent=11 // pred_fallthru
          _
        // Predicated region
        $region21: #{tpu_custom_call.1} parent=11 // pred_check
          %p193 = pneg %p104
        $region22: #{tpu_custom_call.1} parent=11 // pred_check_branch
          %195 = sbr.rel (%p193) target = $region24
        $region23: #{tpu_custom_call.1} parent=11 // pred_region
          _
        $region24: #{tpu_custom_call.1} parent=11 // pred_fallthru
          _
        // Predicated region
        $region25: #{tpu_custom_call.1} parent=11 // pred_check
          %p196 = pneg %p125
        $region26: #{tpu_custom_call.1} parent=11 // pred_check_branch
          %198 = sbr.rel (%p196) target = $region28
        $region27: #{tpu_custom_call.1} parent=11 // pred_region
          _
        $region28: #{tpu_custom_call.1} parent=11 // pred_fallthru
          _
        // Predicated region
        $region29: #{tpu_custom_call.1} parent=11 // pred_check
          %p199 = pneg %p146
        $region30: #{tpu_custom_call.1} parent=11 // pred_check_branch
          %201 = sbr.rel (%p199) target = $region32
        $region31: #{tpu_custom_call.1} parent=11 // pred_region
          _
        $region32: #{tpu_custom_call.1} parent=11 // pred_fallthru
          _
      $region12: #{tpu_custom_call.1} parent=5 // pred_fallthru
        _
      %p202 = scmp.lt.s32.totalorder %s15, 2
      // Predicated region
      $region33: #{tpu_custom_call.1} parent=5 // pred_check
        %p203 = pneg %p202
      $region34: #{tpu_custom_call.1} parent=5 // pred_check_branch
        %205 = sbr.rel (%p203) target = $region36
      $region35: #{tpu_custom_call.1} parent=5 // pred_region
        // Predicated region
        $region37: #{tpu_custom_call.1} parent=35 // pred_check
          %p206 = pneg %p35
        $region38: #{tpu_custom_call.1} parent=35 // pred_check_branch
          %208 = sbr.rel (%p206) target = $region40
        $region39: #{tpu_custom_call.1} parent=35 // pred_region
          %p209 = scmp.lt.s32.totalorder %s15, 1
          %s210 = scalar_select %p209, %s15, 1
          %s211 = smul.addr %s210, 2
          %s212 = smul.addr %s211, 4
          %s213 = scalar_lea.vmem %s0, %s212
        $region40: #{tpu_custom_call.1} parent=35 // pred_fallthru
          _
      $region36: #{tpu_custom_call.1} parent=5 // pred_fallthru
        _
      %p214 = scmp.le.s32.totalorder 1, %s15
      %p215 = scmp.lt.s32.totalorder %s15, 3
      %p216 = pnand %p214, %p215
      %p217 = pneg %p216
      // Predicated region
      $region41: #{tpu_custom_call.1} parent=5 // pred_check
        _
      $region42: #{tpu_custom_call.1} parent=5 // pred_check_branch
        %219 = sbr.rel (%p216) target = $region44
      $region43: #{tpu_custom_call.1} parent=5 // pred_region
        %s220 = ssub.s32 %s15, 1
        %p221 = scmp.lt.s32.totalorder %s20, 1
        %s222 = scalar_select %p221, %s20, 1
        %s223 = smul.addr %s222, 2
        %s224 = smul.addr %s223, 4
        %s225 = scalar_lea.vmem %s0, %s224
        %p226 = pneg %p41
        %p227 = pneg %p38
        %p228 = pneg %p62
        %p229 = pneg %p59
        %p230 = pneg %p83
        %p231 = pneg %p80
        %p232 = pneg %p104
        %p233 = pneg %p101
        %p234 = pneg %p125
        %p235 = pneg %p122
        %p236 = pneg %p146
        %p237 = pneg %p143
        %p238 = pneg %p172
        %p239 = pneg %p169
        %s240 = sand.u32 %s159, 1
        %s241 = scalar_lea.sflag [#allocation3], %s240
        %s242 = sand.u32 %s159, 1
        %s243 = smul.addr %s242, 16
        %s244 = scalar_lea.vmem [#allocation2], %s243
        %p245 = scmp.lt.s32.totalorder %s20, 1
        %s246 = scalar_select %p245, %s20, 1
        %s247 = smul.addr %s246, 2
        %s248 = smul.addr %s247, 4
        %s249 = scalar_lea.vmem %s0, %s248
        %v250 = vld [vmem:[%s5] ss:$4 sm:$0x3]
        %s251 = scalar_lea.vmem %s5, 1
        %v252 = vld [vmem:[%s251] ss:$4 sm:$0x3]
        %s253 = scalar_lea.vmem %s5, 2
        %v254 = vld [vmem:[%s253] ss:$4 sm:$0x3]
        %s255 = scalar_lea.vmem %s5, 3
        %v256 = vld [vmem:[%s255] ss:$4 sm:$0x3]
        %v257 = vld [vmem:[%s249] sm:$0xff]
        %v259 = vcombine.high %v257, %v257
        %261 = vrot.lane.b32.xlu0 %v257, 127
        %v262 = vpop.permute.xlu0 %261
        %263 = vrot.lane.b32.xlu0 %v259, 127
        %v264 = vpop.permute.xlu0 %263
        %v265 = vlaneseq
        %v266 = vand.u32 %v265, 127
        %vm267 = vcmp.lt.s32.totalorder %v266, 127
        %v268 = vsel %vm267, %v262, %v264
        %v269 = vsel %vm267, %v264, %v262
        %v271 = vlaneseq
        %v272 = vshrl.u32 %v271, 7
        %v273 = vsub.s32 0, %v272
        %v274 = vrot.slane %v256, %v273
        %v275 = vlaneseq
        %v276 = vshrl.u32 %v275, 7
        %v277 = vsub.s32 1, %v276
        %v278 = vrot.slane %v256, %v277
        %v281 = vmul.f32 %v268, %v274
        %v282 = vmul.f32 %v269, %v278
        %283 = vrot.lane.b32.xlu0 %v257, 112
        %v284 = vpop.permute.xlu0 %283
        %285 = vrot.lane.b32.xlu0 %v259, 112
        %v286 = vpop.permute.xlu0 %285
        %vm287 = vcmp.lt.s32.totalorder %v266, 112
        %v288 = vsel %vm287, %v284, %v286
        %v289 = vsel %vm287, %v286, %v284
        %v291 = vlaneseq
        %v292 = vshrl.u32 %v291, 7
        %v293 = vsub.s32 0, %v292
        %v294 = vrot.slane %v252, %v293
        %v295 = vlaneseq
        %v296 = vshrl.u32 %v295, 7
        %v297 = vsub.s32 1, %v296
        %v298 = vrot.slane %v252, %v297
        %v301 = vmul.f32 %v288, %v294
        %v302 = vmul.f32 %v289, %v298
        %303 = vrot.lane.b32.xlu0 %v257, 111
        %v304 = vpop.permute.xlu0 %303
        %305 = vrot.lane.b32.xlu0 %v259, 111
        %v306 = vpop.permute.xlu0 %305
        %vm307 = vcmp.lt.s32.totalorder %v266, 111
        %v308 = vsel %vm307, %v304, %v306
        %v309 = vsel %vm307, %v306, %v304
        %v310 = vmul.f32 %v252, %v256
        %v312 = vlaneseq
        %v313 = vshrl.u32 %v312, 7
        %v314 = vsub.s32 0, %v313
        %v315 = vrot.slane %v310, %v314
        %v316 = vlaneseq
        %v317 = vshrl.u32 %v316, 7
        %v318 = vsub.s32 1, %v317
        %v319 = vrot.slane %v310, %v318
        %v322 = vmul.f32 %v308, %v315
        %v323 = vmul.f32 %v309, %v319
        %v324 = vld [vmem:[%s1] sm:$0xff]
        %v325 = vld [vmem:[%s1 + $0x8] sm:$0xff]
        %s326 = scalar_lea.vmem %s1, 16
        %v327 = vld [vmem:[%s326] sm:$0xff]
        %v328 = vld [vmem:[%s326 + $0x8] sm:$0xff]
        %vm329 = vcmask 31744
        %v331 = vsel %vm329, %v327, 0
        %v334 = vsel %vm329, %v328, 0
        %vm336 = vcmask 1043456
        %v338 = vsel %vm336, %v281, 0
        %v341 = vsel %vm336, %v282, 0
        %343 = vmatprep.subr.mxu0 0.0
        %344 = vmatpush1.msra.mxu0 0.0
        %345 = vmatprep.subr.mxu0 0.0
        %346 = vmatpush1.msra.mxu0 0.0
        %347 = vmatprep.subr.mxu0 0.0
        %348 = vmatpush1.msra.mxu0 0.0
        %349 = vmatprep.subr.mxu0 0.0
        %350 = vmatpush1.msra.mxu0 0.0
        %351 = vmatprep.subr.mxu0 0.0
        %352 = vmatpush1.msra.mxu0 0.0
        %353 = vmatprep.subr.mxu0 0.0
        %354 = vmatpush1.msra.mxu0 0.0
        %355 = vmatprep.subr.mxu0 0.0
        %356 = vmatpush1.msra.mxu0 0.0
        %357 = vmatprep.subr.mxu0 0.0
        %358 = vmatpush1.msra.mxu0 0.0
        %359 = vmatprep.subr.mxu0 0.0
        %360 = vmatpush1.msra.mxu0 0.0
        %361 = vmatprep.subr.mxu0 0.0
        %362 = vmatpush1.msra.mxu0 0.0
        %363 = vmatprep.subr.mxu0 0.0
        %364 = vmatpush1.msra.mxu0 0.0
        %365 = vmatprep.subr.mxu0 0.0
        %366 = vmatpush1.msra.mxu0 0.0
        %367 = vmatprep.subr.mxu0 0.0
        %368 = vmatpush1.msra.mxu0 0.0
        %369 = vmatprep.subr.mxu0 0.0
        %370 = vmatpush1.msra.mxu0 0.0
        %371 = vmatprep.subr.mxu0 0.0
        %372 = vmatpush1.msra.mxu0 0.0
        %373 = vmatprep.subr.mxu0 %v341
        %374 = vmatpush1.msra.mxu0 %v338
        %375 = vmatprep.subr.mxu0 0.0
        %376 = vmatpush2.msra.mxu0 0.0
        %377 = vmatprep.subr.mxu0 0.0
        %378 = vmatpush2.msra.mxu0 0.0
        %379 = vmatprep.subr.mxu0 0.0
        %380 = vmatpush2.msra.mxu0 0.0
        %381 = vmatprep.subr.mxu0 0.0
        %382 = vmatpush2.msra.mxu0 0.0
        %383 = vmatprep.subr.mxu0 0.0
        %384 = vmatpush2.msra.mxu0 0.0
        %385 = vmatprep.subr.mxu0 0.0
        %386 = vmatpush2.msra.mxu0 0.0
        %387 = vmatprep.subr.mxu0 0.0
        %388 = vmatpush2.msra.mxu0 0.0
        %389 = vmatprep.subr.mxu0 0.0
        %390 = vmatpush2.msra.mxu0 0.0
        %391 = vmatprep.subr.mxu0 0.0
        %392 = vmatpush2.msra.mxu0 0.0
        %393 = vmatprep.subr.mxu0 0.0
        %394 = vmatpush2.msra.mxu0 0.0
        %395 = vmatprep.subr.mxu0 0.0
        %396 = vmatpush2.msra.mxu0 0.0
        %397 = vmatprep.subr.mxu0 0.0
        %398 = vmatpush2.msra.mxu0 0.0
        %399 = vmatprep.subr.mxu0 0.0
        %400 = vmatpush2.msra.mxu0 0.0
        %401 = vmatprep.subr.mxu0 0.0
        %402 = vmatpush2.msra.mxu0 0.0
        %403 = vmatprep.subr.mxu0 0.0
        %404 = vmatpush2.msra.mxu0 0.0
        %405 = vmatprep.subr.mxu0 0.0
        %406 = vmatpush2.msra.mxu0 0.0
        %407 = vmatprep.mubr.f32.mxu0 0.0
        %408 = vmatmul.mubr.f32.gmra.mxu0 %v331
        %v409 = vpop.f32.mrf.mxu0
        %v410 = vadd.f32 0.0, %v409
        %v411 = vpop.f32.mrf.mxu0
        %v412 = vadd.f32 0.0, %v411
        %413 = vmatprep.mubr.f32.mxu0 0.0
        %414 = vmatmul.mubr.f32.gmra.mxu0 %v334
        %v415 = vpop.f32.mrf.mxu0
        %v416 = vadd.f32 0.0, %v415
        %v417 = vpop.f32.mrf.mxu0
        %v418 = vadd.f32 0.0, %v417
        %419 = vdwg.mxu0
        %v421 = vsel %vm329, %v324, 0
        %v424 = vsel %vm329, %v325, 0
        %v426 = vsel %vm336, %v257, 0
        %v428 = vsel %vm336, %v259, 0
        %430 = vmatprep.subr.mxu0 0.0
        %431 = vmatpush1.msra.mxu0 0.0
        %432 = vmatprep.subr.mxu0 0.0
        %433 = vmatpush1.msra.mxu0 0.0
        %434 = vmatprep.subr.mxu0 0.0
        %435 = vmatpush1.msra.mxu0 0.0
        %436 = vmatprep.subr.mxu0 0.0
        %437 = vmatpush1.msra.mxu0 0.0
        %438 = vmatprep.subr.mxu0 0.0
        %439 = vmatpush1.msra.mxu0 0.0
        %440 = vmatprep.subr.mxu0 0.0
        %441 = vmatpush1.msra.mxu0 0.0
        %442 = vmatprep.subr.mxu0 0.0
        %443 = vmatpush1.msra.mxu0 0.0
        %444 = vmatprep.subr.mxu0 0.0
        %445 = vmatpush1.msra.mxu0 0.0
        %446 = vmatprep.subr.mxu0 0.0
        %447 = vmatpush1.msra.mxu0 0.0
        %448 = vmatprep.subr.mxu0 0.0
        %449 = vmatpush1.msra.mxu0 0.0
        %450 = vmatprep.subr.mxu0 0.0
        %451 = vmatpush1.msra.mxu0 0.0
        %452 = vmatprep.subr.mxu0 0.0
        %453 = vmatpush1.msra.mxu0 0.0
        %454 = vmatprep.subr.mxu0 0.0
        %455 = vmatpush1.msra.mxu0 0.0
        %456 = vmatprep.subr.mxu0 0.0
        %457 = vmatpush1.msra.mxu0 0.0
        %458 = vmatprep.subr.mxu0 0.0
        %459 = vmatpush1.msra.mxu0 0.0
        %460 = vmatprep.subr.mxu0 %v428
        %461 = vmatpush1.msra.mxu0 %v426
        %462 = vmatprep.subr.mxu0 0.0
        %463 = vmatpush2.msra.mxu0 0.0
        %464 = vmatprep.subr.mxu0 0.0
        %465 = vmatpush2.msra.mxu0 0.0
        %466 = vmatprep.subr.mxu0 0.0
        %467 = vmatpush2.msra.mxu0 0.0
        %468 = vmatprep.subr.mxu0 0.0
        %469 = vmatpush2.msra.mxu0 0.0
        %470 = vmatprep.subr.mxu0 0.0
        %471 = vmatpush2.msra.mxu0 0.0
        %472 = vmatprep.subr.mxu0 0.0
        %473 = vmatpush2.msra.mxu0 0.0
        %474 = vmatprep.subr.mxu0 0.0
        %475 = vmatpush2.msra.mxu0 0.0
        %476 = vmatprep.subr.mxu0 0.0
        %477 = vmatpush2.msra.mxu0 0.0
        %478 = vmatprep.subr.mxu0 0.0
        %479 = vmatpush2.msra.mxu0 0.0
        %480 = vmatprep.subr.mxu0 0.0
        %481 = vmatpush2.msra.mxu0 0.0
        %482 = vmatprep.subr.mxu0 0.0
        %483 = vmatpush2.msra.mxu0 0.0
        %484 = vmatprep.subr.mxu0 0.0
        %485 = vmatpush2.msra.mxu0 0.0
        %486 = vmatprep.subr.mxu0 0.0
        %487 = vmatpush2.msra.mxu0 0.0
        %488 = vmatprep.subr.mxu0 0.0
        %489 = vmatpush2.msra.mxu0 0.0
        %490 = vmatprep.subr.mxu0 0.0
        %491 = vmatpush2.msra.mxu0 0.0
        %492 = vmatprep.subr.mxu0 0.0
        %493 = vmatpush2.msra.mxu0 0.0
        %494 = vmatprep.mubr.f32.mxu0 0.0
        %495 = vmatmul.mubr.f32.gmra.mxu0 %v421
        %v496 = vpop.f32.mrf.mxu0
        %v497 = vadd.f32 %v410, %v496
        %v498 = vpop.f32.mrf.mxu0
        %v499 = vadd.f32 %v412, %v498
        %500 = vmatprep.mubr.f32.mxu0 0.0
        %501 = vmatmul.mubr.f32.gmra.mxu0 %v424
        %v502 = vpop.f32.mrf.mxu0
        %v503 = vadd.f32 %v416, %v502
        %v504 = vpop.f32.mrf.mxu0
        %v505 = vadd.f32 %v418, %v504
        %506 = vdwg.mxu0
        %s507 = scalar_lea.vmem %s1, 32
        %v508 = vld [vmem:[%s507] sm:$0xff]
        %v509 = vld [vmem:[%s507 + $0x8] sm:$0xff]
        %v511 = vsel %vm329, %v508, 0
        %v514 = vsel %vm329, %v509, 0
        %v517 = vsel %vm336, %v301, 0
        %v520 = vsel %vm336, %v302, 0
        %522 = vmatprep.subr.mxu0 0.0
        %523 = vmatpush1.msra.mxu0 0.0
        %524 = vmatprep.subr.mxu0 0.0
        %525 = vmatpush1.msra.mxu0 0.0
        %526 = vmatprep.subr.mxu0 0.0
        %527 = vmatpush1.msra.mxu0 0.0
        %528 = vmatprep.subr.mxu0 0.0
        %529 = vmatpush1.msra.mxu0 0.0
        %530 = vmatprep.subr.mxu0 0.0
        %531 = vmatpush1.msra.mxu0 0.0
        %532 = vmatprep.subr.mxu0 0.0
        %533 = vmatpush1.msra.mxu0 0.0
        %534 = vmatprep.subr.mxu0 0.0
        %535 = vmatpush1.msra.mxu0 0.0
        %536 = vmatprep.subr.mxu0 0.0
        %537 = vmatpush1.msra.mxu0 0.0
        %538 = vmatprep.subr.mxu0 0.0
        %539 = vmatpush1.msra.mxu0 0.0
        %540 = vmatprep.subr.mxu0 0.0
        %541 = vmatpush1.msra.mxu0 0.0
        %542 = vmatprep.subr.mxu0 0.0
        %543 = vmatpush1.msra.mxu0 0.0
        %544 = vmatprep.subr.mxu0 0.0
        %545 = vmatpush1.msra.mxu0 0.0
        %546 = vmatprep.subr.mxu0 0.0
        %547 = vmatpush1.msra.mxu0 0.0
        %548 = vmatprep.subr.mxu0 0.0
        %549 = vmatpush1.msra.mxu0 0.0
        %550 = vmatprep.subr.mxu0 0.0
        %551 = vmatpush1.msra.mxu0 0.0
        %552 = vmatprep.subr.mxu0 %v520
        %553 = vmatpush1.msra.mxu0 %v517
        %554 = vmatprep.subr.mxu0 0.0
        %555 = vmatpush2.msra.mxu0 0.0
        %556 = vmatprep.subr.mxu0 0.0
        %557 = vmatpush2.msra.mxu0 0.0
        %558 = vmatprep.subr.mxu0 0.0
        %559 = vmatpush2.msra.mxu0 0.0
        %560 = vmatprep.subr.mxu0 0.0
        %561 = vmatpush2.msra.mxu0 0.0
        %562 = vmatprep.subr.mxu0 0.0
        %563 = vmatpush2.msra.mxu0 0.0
        %564 = vmatprep.subr.mxu0 0.0
        %565 = vmatpush2.msra.mxu0 0.0
        %566 = vmatprep.subr.mxu0 0.0
        %567 = vmatpush2.msra.mxu0 0.0
        %568 = vmatprep.subr.mxu0 0.0
        %569 = vmatpush2.msra.mxu0 0.0
        %570 = vmatprep.subr.mxu0 0.0
        %571 = vmatpush2.msra.mxu0 0.0
        %572 = vmatprep.subr.mxu0 0.0
        %573 = vmatpush2.msra.mxu0 0.0
        %574 = vmatprep.subr.mxu0 0.0
        %575 = vmatpush2.msra.mxu0 0.0
        %576 = vmatprep.subr.mxu0 0.0
        %577 = vmatpush2.msra.mxu0 0.0
        %578 = vmatprep.subr.mxu0 0.0
        %579 = vmatpush2.msra.mxu0 0.0
        %580 = vmatprep.subr.mxu0 0.0
        %581 = vmatpush2.msra.mxu0 0.0
        %582 = vmatprep.subr.mxu0 0.0
        %583 = vmatpush2.msra.mxu0 0.0
        %584 = vmatprep.subr.mxu0 0.0
        %585 = vmatpush2.msra.mxu0 0.0
        %586 = vmatprep.mubr.f32.mxu0 0.0
        %587 = vmatmul.mubr.f32.gmra.mxu0 %v511
        %v588 = vpop.f32.mrf.mxu0
        %v589 = vadd.f32 0.0, %v588
        %v590 = vpop.f32.mrf.mxu0
        %v591 = vadd.f32 0.0, %v590
        %592 = vmatprep.mubr.f32.mxu0 0.0
        %593 = vmatmul.mubr.f32.gmra.mxu0 %v514
        %v594 = vpop.f32.mrf.mxu0
        %v595 = vadd.f32 0.0, %v594
        %v596 = vpop.f32.mrf.mxu0
        %v597 = vadd.f32 0.0, %v596
        %598 = vdwg.mxu0
        %v599 = vadd.f32 %v497, %v589
        %v600 = vadd.f32 %v499, %v591
        %v601 = vadd.f32 %v503, %v595
        %v602 = vadd.f32 %v505, %v597
        %s603 = scalar_lea.vmem %s1, 48
        %v604 = vld [vmem:[%s603] sm:$0xff]
        %v605 = vld [vmem:[%s603 + $0x8] sm:$0xff]
        %v607 = vsel %vm329, %v604, 0
        %v610 = vsel %vm329, %v605, 0
        %v613 = vsel %vm336, %v322, 0
        %v616 = vsel %vm336, %v323, 0
        %618 = vmatprep.subr.mxu0 0.0
        %619 = vmatpush1.msra.mxu0 0.0
        %620 = vmatprep.subr.mxu0 0.0
        %621 = vmatpush1.msra.mxu0 0.0
        %622 = vmatprep.subr.mxu0 0.0
        %623 = vmatpush1.msra.mxu0 0.0
        %624 = vmatprep.subr.mxu0 0.0
        %625 = vmatpush1.msra.mxu0 0.0
        %626 = vmatprep.subr.mxu0 0.0
        %627 = vmatpush1.msra.mxu0 0.0
        %628 = vmatprep.subr.mxu0 0.0
        %629 = vmatpush1.msra.mxu0 0.0
        %630 = vmatprep.subr.mxu0 0.0
        %631 = vmatpush1.msra.mxu0 0.0
        %632 = vmatprep.subr.mxu0 0.0
        %633 = vmatpush1.msra.mxu0 0.0
        %634 = vmatprep.subr.mxu0 0.0
        %635 = vmatpush1.msra.mxu0 0.0
        %636 = vmatprep.subr.mxu0 0.0
        %637 = vmatpush1.msra.mxu0 0.0
        %638 = vmatprep.subr.mxu0 0.0
        %639 = vmatpush1.msra.mxu0 0.0
        %640 = vmatprep.subr.mxu0 0.0
        %641 = vmatpush1.msra.mxu0 0.0
        %642 = vmatprep.subr.mxu0 0.0
        %643 = vmatpush1.msra.mxu0 0.0
        %644 = vmatprep.subr.mxu0 0.0
        %645 = vmatpush1.msra.mxu0 0.0
        %646 = vmatprep.subr.mxu0 0.0
        %647 = vmatpush1.msra.mxu0 0.0
        %648 = vmatprep.subr.mxu0 %v616
        %649 = vmatpush1.msra.mxu0 %v613
        %650 = vmatprep.subr.mxu0 0.0
        %651 = vmatpush2.msra.mxu0 0.0
        %652 = vmatprep.subr.mxu0 0.0
        %653 = vmatpush2.msra.mxu0 0.0
        %654 = vmatprep.subr.mxu0 0.0
        %655 = vmatpush2.msra.mxu0 0.0
        %656 = vmatprep.subr.mxu0 0.0
        %657 = vmatpush2.msra.mxu0 0.0
        %658 = vmatprep.subr.mxu0 0.0
        %659 = vmatpush2.msra.mxu0 0.0
        %660 = vmatprep.subr.mxu0 0.0
        %661 = vmatpush2.msra.mxu0 0.0
        %662 = vmatprep.subr.mxu0 0.0
        %663 = vmatpush2.msra.mxu0 0.0
        %664 = vmatprep.subr.mxu0 0.0
        %665 = vmatpush2.msra.mxu0 0.0
        %666 = vmatprep.subr.mxu0 0.0
        %667 = vmatpush2.msra.mxu0 0.0
        %668 = vmatprep.subr.mxu0 0.0
        %669 = vmatpush2.msra.mxu0 0.0
        %670 = vmatprep.subr.mxu0 0.0
        %671 = vmatpush2.msra.mxu0 0.0
        %672 = vmatprep.subr.mxu0 0.0
        %673 = vmatpush2.msra.mxu0 0.0
        %674 = vmatprep.subr.mxu0 0.0
        %675 = vmatpush2.msra.mxu0 0.0
        %676 = vmatprep.subr.mxu0 0.0
        %677 = vmatpush2.msra.mxu0 0.0
        %678 = vmatprep.subr.mxu0 0.0
        %679 = vmatpush2.msra.mxu0 0.0
        %680 = vmatprep.subr.mxu0 0.0
        %681 = vmatpush2.msra.mxu0 0.0
        %682 = vmatprep.mubr.f32.mxu0 0.0
        %683 = vmatmul.mubr.f32.gmra.mxu0 %v607
        %v684 = vpop.f32.mrf.mxu0
        %v685 = vadd.f32 0.0, %v684
        %v686 = vpop.f32.mrf.mxu0
        %v687 = vadd.f32 0.0, %v686
        %688 = vmatprep.mubr.f32.mxu0 0.0
        %689 = vmatmul.mubr.f32.gmra.mxu0 %v610
        %v690 = vpop.f32.mrf.mxu0
        %v691 = vadd.f32 0.0, %v690
        %v692 = vpop.f32.mrf.mxu0
        %v693 = vadd.f32 0.0, %v692
        %694 = vdwg.mxu0
        %v695 = vadd.f32 %v599, %v685
        %v696 = vadd.f32 %v600, %v687
        %v697 = vadd.f32 %v601, %v691
        %v698 = vadd.f32 %v602, %v693
        %v699 = vld [vmem:[%s2] sm:$0xff]
        %v700 = vld [vmem:[%s2 + $0x8] sm:$0xff]
        %702 = vset.pattern.permute.xlu0 0
        %703 = vperm.xlu0 %702, %v699
        %v704 = vpop.permute.xlu0 %703
        %707 = vset.pattern.permute.xlu0 0
        %708 = vperm.xlu0 %707, %v700
        %v709 = vpop.permute.xlu0 %708
        %v711 = vadd.f32 %v695, %v704
        %v712 = vadd.f32 %v696, %v704
        %v713 = vadd.f32 %v697, %v709
        %v714 = vadd.f32 %v698, %v709
        %v715 = vmax.f32 %v711, 0.0
        %v716 = vmax.f32 %v712, 0.0
        %v717 = vmax.f32 %v713, 0.0
        %v718 = vmax.f32 %v714, 0.0
        %v721 = vrot.slane %v717, 4
        %v722 = vrot.slane %v718, 4
        %725 = vrot.lane.b32.xlu0 %v721, 17
        %v726 = vpop.permute.xlu0 %725
        %727 = vrot.lane.b32.xlu0 %v722, 17
        %v728 = vpop.permute.xlu0 %727
        %vm729 = vcmp.lt.s32.totalorder %v266, 17
        %v730 = vsel %vm729, %v726, %v728
        %v731 = vsel %vm729, %v728, %v726
        %v732 = vmul.f32 %v250, %v254
        %v734 = vlaneseq
        %v735 = vshrl.u32 %v734, 7
        %v736 = vsub.s32 0, %v735
        %v737 = vrot.slane %v732, %v736
        %v738 = vlaneseq
        %v739 = vshrl.u32 %v738, 7
        %v740 = vsub.s32 1, %v739
        %v741 = vrot.slane %v732, %v740
        %v744 = vmul.f32 %v731, %v737
        %v745 = vmul.f32 %v730, %v741
        %v746 = vld [vmem:[%s3] sm:$0xff]
        %747 = vrot.lane.b32.xlu0 %v717, 16
        %v748 = vpop.permute.xlu0 %747
        %749 = vrot.lane.b32.xlu0 %v718, 16
        %v750 = vpop.permute.xlu0 %749
        %vm751 = vcmp.lt.s32.totalorder %v266, 16
        %v752 = vsel %vm751, %v748, %v750
        %v753 = vsel %vm751, %v750, %v748
        %v755 = vlaneseq
        %v756 = vshrl.u32 %v755, 7
        %v757 = vsub.s32 0, %v756
        %v758 = vrot.slane %v250, %v757
        %v759 = vlaneseq
        %v760 = vshrl.u32 %v759, 7
        %v761 = vsub.s32 1, %v760
        %v762 = vrot.slane %v250, %v761
        %v765 = vmul.f32 %v753, %v758
        %v766 = vmul.f32 %v752, %v762
        %s767 = scalar_lea.vmem %s3, 8
        %v768 = vld [vmem:[%s767] sm:$0xff]
        %v770 = vsel %vm329, %v768, 0
        %v773 = vsel %vm336, %v765, 0
        %v776 = vsel %vm336, %v766, 0
        %778 = vmatprep.subr.mxu0 0.0
        %779 = vmatpush1.msra.mxu0 0.0
        %780 = vmatprep.subr.mxu0 0.0
        %781 = vmatpush1.msra.mxu0 0.0
        %782 = vmatprep.subr.mxu0 0.0
        %783 = vmatpush1.msra.mxu0 0.0
        %784 = vmatprep.subr.mxu0 0.0
        %785 = vmatpush1.msra.mxu0 0.0
        %786 = vmatprep.subr.mxu0 0.0
        %787 = vmatpush1.msra.mxu0 0.0
        %788 = vmatprep.subr.mxu0 0.0
        %789 = vmatpush1.msra.mxu0 0.0
        %790 = vmatprep.subr.mxu0 0.0
        %791 = vmatpush1.msra.mxu0 0.0
        %792 = vmatprep.subr.mxu0 0.0
        %793 = vmatpush1.msra.mxu0 0.0
        %794 = vmatprep.subr.mxu0 0.0
        %795 = vmatpush1.msra.mxu0 0.0
        %796 = vmatprep.subr.mxu0 0.0
        %797 = vmatpush1.msra.mxu0 0.0
        %798 = vmatprep.subr.mxu0 0.0
        %799 = vmatpush1.msra.mxu0 0.0
        %800 = vmatprep.subr.mxu0 0.0
        %801 = vmatpush1.msra.mxu0 0.0
        %802 = vmatprep.subr.mxu0 0.0
        %803 = vmatpush1.msra.mxu0 0.0
        %804 = vmatprep.subr.mxu0 0.0
        %805 = vmatpush1.msra.mxu0 0.0
        %806 = vmatprep.subr.mxu0 0.0
        %807 = vmatpush1.msra.mxu0 0.0
        %808 = vmatprep.subr.mxu0 %v776
        %809 = vmatpush1.msra.mxu0 %v773
        %810 = vmatprep.subr.mxu0 0.0
        %811 = vmatpush2.msra.mxu0 0.0
        %812 = vmatprep.subr.mxu0 0.0
        %813 = vmatpush2.msra.mxu0 0.0
        %814 = vmatprep.subr.mxu0 0.0
        %815 = vmatpush2.msra.mxu0 0.0
        %816 = vmatprep.subr.mxu0 0.0
        %817 = vmatpush2.msra.mxu0 0.0
        %818 = vmatprep.subr.mxu0 0.0
        %819 = vmatpush2.msra.mxu0 0.0
        %820 = vmatprep.subr.mxu0 0.0
        %821 = vmatpush2.msra.mxu0 0.0
        %822 = vmatprep.subr.mxu0 0.0
        %823 = vmatpush2.msra.mxu0 0.0
        %824 = vmatprep.subr.mxu0 0.0
        %825 = vmatpush2.msra.mxu0 0.0
        %826 = vmatprep.subr.mxu0 0.0
        %827 = vmatpush2.msra.mxu0 0.0
        %828 = vmatprep.subr.mxu0 0.0
        %829 = vmatpush2.msra.mxu0 0.0
        %830 = vmatprep.subr.mxu0 0.0
        %831 = vmatpush2.msra.mxu0 0.0
        %832 = vmatprep.subr.mxu0 0.0
        %833 = vmatpush2.msra.mxu0 0.0
        %834 = vmatprep.subr.mxu0 0.0
        %835 = vmatpush2.msra.mxu0 0.0
        %836 = vmatprep.subr.mxu0 0.0
        %837 = vmatpush2.msra.mxu0 0.0
        %838 = vmatprep.subr.mxu0 0.0
        %839 = vmatpush2.msra.mxu0 0.0
        %840 = vmatprep.subr.mxu0 0.0
        %841 = vmatpush2.msra.mxu0 0.0
        %842 = vmatprep.mubr.f32.mxu0 0.0
        %843 = vmatmul.mubr.f32.gmra.mxu0 %v770
        %v844 = vpop.f32.mrf.mxu0
        %v845 = vadd.f32 0.0, %v844
        %v846 = vpop.f32.mrf.mxu0
        %v847 = vadd.f32 0.0, %v846
        %848 = vdwg.mxu0
        %v850 = vsel %vm329, %v746, 0
        %v853 = vsel %vm336, %v744, 0
        %v856 = vsel %vm336, %v745, 0
        %858 = vmatprep.subr.mxu0 0.0
        %859 = vmatpush1.msra.mxu0 0.0
        %860 = vmatprep.subr.mxu0 0.0
        %861 = vmatpush1.msra.mxu0 0.0
        %862 = vmatprep.subr.mxu0 0.0
        %863 = vmatpush1.msra.mxu0 0.0
        %864 = vmatprep.subr.mxu0 0.0
        %865 = vmatpush1.msra.mxu0 0.0
        %866 = vmatprep.subr.mxu0 0.0
        %867 = vmatpush1.msra.mxu0 0.0
        %868 = vmatprep.subr.mxu0 0.0
        %869 = vmatpush1.msra.mxu0 0.0
        %870 = vmatprep.subr.mxu0 0.0
        %871 = vmatpush1.msra.mxu0 0.0
        %872 = vmatprep.subr.mxu0 0.0
        %873 = vmatpush1.msra.mxu0 0.0
        %874 = vmatprep.subr.mxu0 0.0
        %875 = vmatpush1.msra.mxu0 0.0
        %876 = vmatprep.subr.mxu0 0.0
        %877 = vmatpush1.msra.mxu0 0.0
        %878 = vmatprep.subr.mxu0 0.0
        %879 = vmatpush1.msra.mxu0 0.0
        %880 = vmatprep.subr.mxu0 0.0
        %881 = vmatpush1.msra.mxu0 0.0
        %882 = vmatprep.subr.mxu0 0.0
        %883 = vmatpush1.msra.mxu0 0.0
        %884 = vmatprep.subr.mxu0 0.0
        %885 = vmatpush1.msra.mxu0 0.0
        %886 = vmatprep.subr.mxu0 0.0
        %887 = vmatpush1.msra.mxu0 0.0
        %888 = vmatprep.subr.mxu0 %v856
        %889 = vmatpush1.msra.mxu0 %v853
        %890 = vmatprep.subr.mxu0 0.0
        %891 = vmatpush2.msra.mxu0 0.0
        %892 = vmatprep.subr.mxu0 0.0
        %893 = vmatpush2.msra.mxu0 0.0
        %894 = vmatprep.subr.mxu0 0.0
        %895 = vmatpush2.msra.mxu0 0.0
        %896 = vmatprep.subr.mxu0 0.0
        %897 = vmatpush2.msra.mxu0 0.0
        %898 = vmatprep.subr.mxu0 0.0
        %899 = vmatpush2.msra.mxu0 0.0
        %900 = vmatprep.subr.mxu0 0.0
        %901 = vmatpush2.msra.mxu0 0.0
        %902 = vmatprep.subr.mxu0 0.0
        %903 = vmatpush2.msra.mxu0 0.0
        %904 = vmatprep.subr.mxu0 0.0
        %905 = vmatpush2.msra.mxu0 0.0
        %906 = vmatprep.subr.mxu0 0.0
        %907 = vmatpush2.msra.mxu0 0.0
        %908 = vmatprep.subr.mxu0 0.0
        %909 = vmatpush2.msra.mxu0 0.0
        %910 = vmatprep.subr.mxu0 0.0
        %911 = vmatpush2.msra.mxu0 0.0
        %912 = vmatprep.subr.mxu0 0.0
        %913 = vmatpush2.msra.mxu0 0.0
        %914 = vmatprep.subr.mxu0 0.0
        %915 = vmatpush2.msra.mxu0 0.0
        %916 = vmatprep.subr.mxu0 0.0
        %917 = vmatpush2.msra.mxu0 0.0
        %918 = vmatprep.subr.mxu0 0.0
        %919 = vmatpush2.msra.mxu0 0.0
        %920 = vmatprep.subr.mxu0 0.0
        %921 = vmatpush2.msra.mxu0 0.0
        %922 = vmatprep.mubr.f32.mxu0 0.0
        %923 = vmatmul.mubr.f32.gmra.mxu0 %v850
        %v924 = vpop.f32.mrf.mxu0
        %v925 = vadd.f32 %v845, %v924
        %v926 = vpop.f32.mrf.mxu0
        %v927 = vadd.f32 %v847, %v926
        %928 = vdwg.mxu0
        %929 = vrot.lane.b32.xlu0 %v721, 16
        %v930 = vpop.permute.xlu0 %929
        %931 = vrot.lane.b32.xlu0 %v722, 16
        %v932 = vpop.permute.xlu0 %931
        %v933 = vsel %vm751, %v930, %v932
        %v934 = vsel %vm751, %v932, %v930
        %v935 = vmul.f32 %v934, %v758
        %v936 = vmul.f32 %v933, %v762
        %s937 = scalar_lea.vmem %s3, 16
        %v938 = vld [vmem:[%s937] sm:$0xff]
        %v940 = vsel %vm329, %v938, 0
        %v943 = vsel %vm336, %v935, 0
        %v946 = vsel %vm336, %v936, 0
        %948 = vmatprep.subr.mxu0 0.0
        %949 = vmatpush1.msra.mxu0 0.0
        %950 = vmatprep.subr.mxu0 0.0
        %951 = vmatpush1.msra.mxu0 0.0
        %952 = vmatprep.subr.mxu0 0.0
        %953 = vmatpush1.msra.mxu0 0.0
        %954 = vmatprep.subr.mxu0 0.0
        %955 = vmatpush1.msra.mxu0 0.0
        %956 = vmatprep.subr.mxu0 0.0
        %957 = vmatpush1.msra.mxu0 0.0
        %958 = vmatprep.subr.mxu0 0.0
        %959 = vmatpush1.msra.mxu0 0.0
        %960 = vmatprep.subr.mxu0 0.0
        %961 = vmatpush1.msra.mxu0 0.0
        %962 = vmatprep.subr.mxu0 0.0
        %963 = vmatpush1.msra.mxu0 0.0
        %964 = vmatprep.subr.mxu0 0.0
        %965 = vmatpush1.msra.mxu0 0.0
        %966 = vmatprep.subr.mxu0 0.0
        %967 = vmatpush1.msra.mxu0 0.0
        %968 = vmatprep.subr.mxu0 0.0
        %969 = vmatpush1.msra.mxu0 0.0
        %970 = vmatprep.subr.mxu0 0.0
        %971 = vmatpush1.msra.mxu0 0.0
        %972 = vmatprep.subr.mxu0 0.0
        %973 = vmatpush1.msra.mxu0 0.0
        %974 = vmatprep.subr.mxu0 0.0
        %975 = vmatpush1.msra.mxu0 0.0
        %976 = vmatprep.subr.mxu0 0.0
        %977 = vmatpush1.msra.mxu0 0.0
        %978 = vmatprep.subr.mxu0 %v946
        %979 = vmatpush1.msra.mxu0 %v943
        %980 = vmatprep.subr.mxu0 0.0
        %981 = vmatpush2.msra.mxu0 0.0
        %982 = vmatprep.subr.mxu0 0.0
        %983 = vmatpush2.msra.mxu0 0.0
        %984 = vmatprep.subr.mxu0 0.0
        %985 = vmatpush2.msra.mxu0 0.0
        %986 = vmatprep.subr.mxu0 0.0
        %987 = vmatpush2.msra.mxu0 0.0
        %988 = vmatprep.subr.mxu0 0.0
        %989 = vmatpush2.msra.mxu0 0.0
        %990 = vmatprep.subr.mxu0 0.0
        %991 = vmatpush2.msra.mxu0 0.0
        %992 = vmatprep.subr.mxu0 0.0
        %993 = vmatpush2.msra.mxu0 0.0
        %994 = vmatprep.subr.mxu0 0.0
        %995 = vmatpush2.msra.mxu0 0.0
        %996 = vmatprep.subr.mxu0 0.0
        %997 = vmatpush2.msra.mxu0 0.0
        %998 = vmatprep.subr.mxu0 0.0
        %999 = vmatpush2.msra.mxu0 0.0
        %1000 = vmatprep.subr.mxu0 0.0
        %1001 = vmatpush2.msra.mxu0 0.0
        %1002 = vmatprep.subr.mxu0 0.0
        %1003 = vmatpush2.msra.mxu0 0.0
        %1004 = vmatprep.subr.mxu0 0.0
        %1005 = vmatpush2.msra.mxu0 0.0
        %1006 = vmatprep.subr.mxu0 0.0
        %1007 = vmatpush2.msra.mxu0 0.0
        %1008 = vmatprep.subr.mxu0 0.0
        %1009 = vmatpush2.msra.mxu0 0.0
        %1010 = vmatprep.subr.mxu0 0.0
        %1011 = vmatpush2.msra.mxu0 0.0
        %1012 = vmatprep.mubr.f32.mxu0 0.0
        %1013 = vmatmul.mubr.f32.gmra.mxu0 %v940
        %v1014 = vpop.f32.mrf.mxu0
        %v1015 = vadd.f32 0.0, %v1014
        %v1016 = vpop.f32.mrf.mxu0
        %v1017 = vadd.f32 0.0, %v1016
        %1018 = vdwg.mxu0
        %v1019 = vadd.f32 %v925, %v1015
        %v1020 = vadd.f32 %v927, %v1017
        %1021 = vrot.lane.b32.xlu0 %v717, 15
        %v1022 = vpop.permute.xlu0 %1021
        %1023 = vrot.lane.b32.xlu0 %v718, 15
        %v1024 = vpop.permute.xlu0 %1023
        %vm1025 = vcmp.lt.s32.totalorder %v266, 15
        %v1026 = vsel %vm1025, %v1022, %v1024
        %v1027 = vsel %vm1025, %v1024, %v1022
        %v1028 = vmul.f32 %v250, %v256
        %v1030 = vlaneseq
        %v1031 = vshrl.u32 %v1030, 7
        %v1032 = vsub.s32 0, %v1031
        %v1033 = vrot.slane %v1028, %v1032
        %v1034 = vlaneseq
        %v1035 = vshrl.u32 %v1034, 7
        %v1036 = vsub.s32 1, %v1035
        %v1037 = vrot.slane %v1028, %v1036
        %v1040 = vmul.f32 %v1027, %v1033
        %v1041 = vmul.f32 %v1026, %v1037
        %s1042 = scalar_lea.vmem %s3, 24
        %v1043 = vld [vmem:[%s1042] sm:$0xff]
        %v1045 = vsel %vm329, %v1043, 0
        %v1048 = vsel %vm336, %v1040, 0
        %v1051 = vsel %vm336, %v1041, 0
        %1053 = vmatprep.subr.mxu0 0.0
        %1054 = vmatpush1.msra.mxu0 0.0
        %1055 = vmatprep.subr.mxu0 0.0
        %1056 = vmatpush1.msra.mxu0 0.0
        %1057 = vmatprep.subr.mxu0 0.0
        %1058 = vmatpush1.msra.mxu0 0.0
        %1059 = vmatprep.subr.mxu0 0.0
        %1060 = vmatpush1.msra.mxu0 0.0
        %1061 = vmatprep.subr.mxu0 0.0
        %1062 = vmatpush1.msra.mxu0 0.0
        %1063 = vmatprep.subr.mxu0 0.0
        %1064 = vmatpush1.msra.mxu0 0.0
        %1065 = vmatprep.subr.mxu0 0.0
        %1066 = vmatpush1.msra.mxu0 0.0
        %1067 = vmatprep.subr.mxu0 0.0
        %1068 = vmatpush1.msra.mxu0 0.0
        %1069 = vmatprep.subr.mxu0 0.0
        %1070 = vmatpush1.msra.mxu0 0.0
        %1071 = vmatprep.subr.mxu0 0.0
        %1072 = vmatpush1.msra.mxu0 0.0
        %1073 = vmatprep.subr.mxu0 0.0
        %1074 = vmatpush1.msra.mxu0 0.0
        %1075 = vmatprep.subr.mxu0 0.0
        %1076 = vmatpush1.msra.mxu0 0.0
        %1077 = vmatprep.subr.mxu0 0.0
        %1078 = vmatpush1.msra.mxu0 0.0
        %1079 = vmatprep.subr.mxu0 0.0
        %1080 = vmatpush1.msra.mxu0 0.0
        %1081 = vmatprep.subr.mxu0 0.0
        %1082 = vmatpush1.msra.mxu0 0.0
        %1083 = vmatprep.subr.mxu0 %v1051
        %1084 = vmatpush1.msra.mxu0 %v1048
        %1085 = vmatprep.subr.mxu0 0.0
        %1086 = vmatpush2.msra.mxu0 0.0
        %1087 = vmatprep.subr.mxu0 0.0
        %1088 = vmatpush2.msra.mxu0 0.0
        %1089 = vmatprep.subr.mxu0 0.0
        %1090 = vmatpush2.msra.mxu0 0.0
        %1091 = vmatprep.subr.mxu0 0.0
        %1092 = vmatpush2.msra.mxu0 0.0
        %1093 = vmatprep.subr.mxu0 0.0
        %1094 = vmatpush2.msra.mxu0 0.0
        %1095 = vmatprep.subr.mxu0 0.0
        %1096 = vmatpush2.msra.mxu0 0.0
        %1097 = vmatprep.subr.mxu0 0.0
        %1098 = vmatpush2.msra.mxu0 0.0
        %1099 = vmatprep.subr.mxu0 0.0
        %1100 = vmatpush2.msra.mxu0 0.0
        %1101 = vmatprep.subr.mxu0 0.0
        %1102 = vmatpush2.msra.mxu0 0.0
        %1103 = vmatprep.subr.mxu0 0.0
        %1104 = vmatpush2.msra.mxu0 0.0
        %1105 = vmatprep.subr.mxu0 0.0
        %1106 = vmatpush2.msra.mxu0 0.0
        %1107 = vmatprep.subr.mxu0 0.0
        %1108 = vmatpush2.msra.mxu0 0.0
        %1109 = vmatprep.subr.mxu0 0.0
        %1110 = vmatpush2.msra.mxu0 0.0
        %1111 = vmatprep.subr.mxu0 0.0
        %1112 = vmatpush2.msra.mxu0 0.0
        %1113 = vmatprep.subr.mxu0 0.0
        %1114 = vmatpush2.msra.mxu0 0.0
        %1115 = vmatprep.subr.mxu0 0.0
        %1116 = vmatpush2.msra.mxu0 0.0
        %1117 = vmatprep.mubr.f32.mxu0 0.0
        %1118 = vmatmul.mubr.f32.gmra.mxu0 %v1045
        %v1119 = vpop.f32.mrf.mxu0
        %v1120 = vadd.f32 0.0, %v1119
        %v1121 = vpop.f32.mrf.mxu0
        %v1122 = vadd.f32 0.0, %v1121
        %1123 = vdwg.mxu0
        %v1124 = vadd.f32 %v1019, %v1120
        %v1125 = vadd.f32 %v1020, %v1122
        %v1128 = vrot.slane %v715, 4
        %v1129 = vrot.slane %v716, 4
        %1132 = vrot.lane.b32.xlu0 %v1128, 1
        %v1133 = vpop.permute.xlu0 %1132
        %1134 = vrot.lane.b32.xlu0 %v1129, 1
        %v1135 = vpop.permute.xlu0 %1134
        %vm1136 = vcmp.lt.s32.totalorder %v266, 1
        %v1137 = vsel %vm1136, %v1133, %v1135
        %v1138 = vsel %vm1136, %v1135, %v1133
        %v1140 = vlaneseq
        %v1141 = vshrl.u32 %v1140, 7
        %v1142 = vsub.s32 0, %v1141
        %v1143 = vrot.slane %v254, %v1142
        %v1144 = vlaneseq
        %v1145 = vshrl.u32 %v1144, 7
        %v1146 = vsub.s32 1, %v1145
        %v1147 = vrot.slane %v254, %v1146
        %v1150 = vmul.f32 %v1138, %v1143
        %v1151 = vmul.f32 %v1137, %v1147
        %s1152 = scalar_lea.vmem %s3, 32
        %v1153 = vld [vmem:[%s1152] sm:$0xff]
        %v1155 = vsel %vm329, %v1153, 0
        %v1158 = vsel %vm336, %v1150, 0
        %v1161 = vsel %vm336, %v1151, 0
        %1163 = vmatprep.subr.mxu0 0.0
        %1164 = vmatpush1.msra.mxu0 0.0
        %1165 = vmatprep.subr.mxu0 0.0
        %1166 = vmatpush1.msra.mxu0 0.0
        %1167 = vmatprep.subr.mxu0 0.0
        %1168 = vmatpush1.msra.mxu0 0.0
        %1169 = vmatprep.subr.mxu0 0.0
        %1170 = vmatpush1.msra.mxu0 0.0
        %1171 = vmatprep.subr.mxu0 0.0
        %1172 = vmatpush1.msra.mxu0 0.0
        %1173 = vmatprep.subr.mxu0 0.0
        %1174 = vmatpush1.msra.mxu0 0.0
        %1175 = vmatprep.subr.mxu0 0.0
        %1176 = vmatpush1.msra.mxu0 0.0
        %1177 = vmatprep.subr.mxu0 0.0
        %1178 = vmatpush1.msra.mxu0 0.0
        %1179 = vmatprep.subr.mxu0 0.0
        %1180 = vmatpush1.msra.mxu0 0.0
        %1181 = vmatprep.subr.mxu0 0.0
        %1182 = vmatpush1.msra.mxu0 0.0
        %1183 = vmatprep.subr.mxu0 0.0
        %1184 = vmatpush1.msra.mxu0 0.0
        %1185 = vmatprep.subr.mxu0 0.0
        %1186 = vmatpush1.msra.mxu0 0.0
        %1187 = vmatprep.subr.mxu0 0.0
        %1188 = vmatpush1.msra.mxu0 0.0
        %1189 = vmatprep.subr.mxu0 0.0
        %1190 = vmatpush1.msra.mxu0 0.0
        %1191 = vmatprep.subr.mxu0 0.0
        %1192 = vmatpush1.msra.mxu0 0.0
        %1193 = vmatprep.subr.mxu0 %v1161
        %1194 = vmatpush1.msra.mxu0 %v1158
        %1195 = vmatprep.subr.mxu0 0.0
        %1196 = vmatpush2.msra.mxu0 0.0
        %1197 = vmatprep.subr.mxu0 0.0
        %1198 = vmatpush2.msra.mxu0 0.0
        %1199 = vmatprep.subr.mxu0 0.0
        %1200 = vmatpush2.msra.mxu0 0.0
        %1201 = vmatprep.subr.mxu0 0.0
        %1202 = vmatpush2.msra.mxu0 0.0
        %1203 = vmatprep.subr.mxu0 0.0
        %1204 = vmatpush2.msra.mxu0 0.0
        %1205 = vmatprep.subr.mxu0 0.0
        %1206 = vmatpush2.msra.mxu0 0.0
        %1207 = vmatprep.subr.mxu0 0.0
        %1208 = vmatpush2.msra.mxu0 0.0
        %1209 = vmatprep.subr.mxu0 0.0
        %1210 = vmatpush2.msra.mxu0 0.0
        %1211 = vmatprep.subr.mxu0 0.0
        %1212 = vmatpush2.msra.mxu0 0.0
        %1213 = vmatprep.subr.mxu0 0.0
        %1214 = vmatpush2.msra.mxu0 0.0
        %1215 = vmatprep.subr.mxu0 0.0
        %1216 = vmatpush2.msra.mxu0 0.0
        %1217 = vmatprep.subr.mxu0 0.0
        %1218 = vmatpush2.msra.mxu0 0.0
        %1219 = vmatprep.subr.mxu0 0.0
        %1220 = vmatpush2.msra.mxu0 0.0
        %1221 = vmatprep.subr.mxu0 0.0
        %1222 = vmatpush2.msra.mxu0 0.0
        %1223 = vmatprep.subr.mxu0 0.0
        %1224 = vmatpush2.msra.mxu0 0.0
        %1225 = vmatprep.subr.mxu0 0.0
        %1226 = vmatpush2.msra.mxu0 0.0
        %1227 = vmatprep.mubr.f32.mxu0 0.0
        %1228 = vmatmul.mubr.f32.gmra.mxu0 %v1155
        %v1229 = vpop.f32.mrf.mxu0
        %v1230 = vadd.f32 0.0, %v1229
        %v1231 = vpop.f32.mrf.mxu0
        %v1232 = vadd.f32 0.0, %v1231
        %1233 = vdwg.mxu0
        %v1234 = vadd.f32 %v1124, %v1230
        %v1235 = vadd.f32 %v1125, %v1232
        %s1236 = scalar_lea.vmem %s3, 40
        %v1237 = vld [vmem:[%s1236] sm:$0xff]
        %v1239 = vsel %vm329, %v1237, 0
        %v1241 = vsel %vm336, %v715, 0
        %v1243 = vsel %vm336, %v716, 0
        %1245 = vmatprep.subr.mxu0 0.0
        %1246 = vmatpush1.msra.mxu0 0.0
        %1247 = vmatprep.subr.mxu0 0.0
        %1248 = vmatpush1.msra.mxu0 0.0
        %1249 = vmatprep.subr.mxu0 0.0
        %1250 = vmatpush1.msra.mxu0 0.0
        %1251 = vmatprep.subr.mxu0 0.0
        %1252 = vmatpush1.msra.mxu0 0.0
        %1253 = vmatprep.subr.mxu0 0.0
        %1254 = vmatpush1.msra.mxu0 0.0
        %1255 = vmatprep.subr.mxu0 0.0
        %1256 = vmatpush1.msra.mxu0 0.0
        %1257 = vmatprep.subr.mxu0 0.0
        %1258 = vmatpush1.msra.mxu0 0.0
        %1259 = vmatprep.subr.mxu0 0.0
        %1260 = vmatpush1.msra.mxu0 0.0
        %1261 = vmatprep.subr.mxu0 0.0
        %1262 = vmatpush1.msra.mxu0 0.0
        %1263 = vmatprep.subr.mxu0 0.0
        %1264 = vmatpush1.msra.mxu0 0.0
        %1265 = vmatprep.subr.mxu0 0.0
        %1266 = vmatpush1.msra.mxu0 0.0
        %1267 = vmatprep.subr.mxu0 0.0
        %1268 = vmatpush1.msra.mxu0 0.0
        %1269 = vmatprep.subr.mxu0 0.0
        %1270 = vmatpush1.msra.mxu0 0.0
        %1271 = vmatprep.subr.mxu0 0.0
        %1272 = vmatpush1.msra.mxu0 0.0
        %1273 = vmatprep.subr.mxu0 0.0
        %1274 = vmatpush1.msra.mxu0 0.0
        %1275 = vmatprep.subr.mxu0 %v1243
        %1276 = vmatpush1.msra.mxu0 %v1241
        %1277 = vmatprep.subr.mxu0 0.0
        %1278 = vmatpush2.msra.mxu0 0.0
        %1279 = vmatprep.subr.mxu0 0.0
        %1280 = vmatpush2.msra.mxu0 0.0
        %1281 = vmatprep.subr.mxu0 0.0
        %1282 = vmatpush2.msra.mxu0 0.0
        %1283 = vmatprep.subr.mxu0 0.0
        %1284 = vmatpush2.msra.mxu0 0.0
        %1285 = vmatprep.subr.mxu0 0.0
        %1286 = vmatpush2.msra.mxu0 0.0
        %1287 = vmatprep.subr.mxu0 0.0
        %1288 = vmatpush2.msra.mxu0 0.0
        %1289 = vmatprep.subr.mxu0 0.0
        %1290 = vmatpush2.msra.mxu0 0.0
        %1291 = vmatprep.subr.mxu0 0.0
        %1292 = vmatpush2.msra.mxu0 0.0
        %1293 = vmatprep.subr.mxu0 0.0
        %1294 = vmatpush2.msra.mxu0 0.0
        %1295 = vmatprep.subr.mxu0 0.0
        %1296 = vmatpush2.msra.mxu0 0.0
        %1297 = vmatprep.subr.mxu0 0.0
        %1298 = vmatpush2.msra.mxu0 0.0
        %1299 = vmatprep.subr.mxu0 0.0
        %1300 = vmatpush2.msra.mxu0 0.0
        %1301 = vmatprep.subr.mxu0 0.0
        %1302 = vmatpush2.msra.mxu0 0.0
        %1303 = vmatprep.subr.mxu0 0.0
        %1304 = vmatpush2.msra.mxu0 0.0
        %1305 = vmatprep.subr.mxu0 0.0
        %1306 = vmatpush2.msra.mxu0 0.0
        %1307 = vmatprep.subr.mxu0 0.0
        %1308 = vmatpush2.msra.mxu0 0.0
        %1309 = vmatprep.mubr.f32.mxu0 0.0
        %1310 = vmatmul.mubr.f32.gmra.mxu0 %v1239
        %v1311 = vpop.f32.mrf.mxu0
        %v1312 = vadd.f32 0.0, %v1311
        %v1313 = vpop.f32.mrf.mxu0
        %v1314 = vadd.f32 0.0, %v1313
        %1315 = vdwg.mxu0
        %v1316 = vadd.f32 %v1234, %v1312
        %v1317 = vadd.f32 %v1235, %v1314
        %s1318 = scalar_lea.vmem %s3, 48
        %v1319 = vld [vmem:[%s1318] sm:$0xff]
        %v1321 = vsel %vm329, %v1319, 0
        %v1323 = vsel %vm336, %v1128, 0
        %v1325 = vsel %vm336, %v1129, 0
        %1327 = vmatprep.subr.mxu0 0.0
        %1328 = vmatpush1.msra.mxu0 0.0
        %1329 = vmatprep.subr.mxu0 0.0
        %1330 = vmatpush1.msra.mxu0 0.0
        %1331 = vmatprep.subr.mxu0 0.0
        %1332 = vmatpush1.msra.mxu0 0.0
        %1333 = vmatprep.subr.mxu0 0.0
        %1334 = vmatpush1.msra.mxu0 0.0
        %1335 = vmatprep.subr.mxu0 0.0
        %1336 = vmatpush1.msra.mxu0 0.0
        %1337 = vmatprep.subr.mxu0 0.0
        %1338 = vmatpush1.msra.mxu0 0.0
        %1339 = vmatprep.subr.mxu0 0.0
        %1340 = vmatpush1.msra.mxu0 0.0
        %1341 = vmatprep.subr.mxu0 0.0
        %1342 = vmatpush1.msra.mxu0 0.0
        %1343 = vmatprep.subr.mxu0 0.0
        %1344 = vmatpush1.msra.mxu0 0.0
        %1345 = vmatprep.subr.mxu0 0.0
        %1346 = vmatpush1.msra.mxu0 0.0
        %1347 = vmatprep.subr.mxu0 0.0
        %1348 = vmatpush1.msra.mxu0 0.0
        %1349 = vmatprep.subr.mxu0 0.0
        %1350 = vmatpush1.msra.mxu0 0.0
        %1351 = vmatprep.subr.mxu0 0.0
        %1352 = vmatpush1.msra.mxu0 0.0
        %1353 = vmatprep.subr.mxu0 0.0
        %1354 = vmatpush1.msra.mxu0 0.0
        %1355 = vmatprep.subr.mxu0 0.0
        %1356 = vmatpush1.msra.mxu0 0.0
        %1357 = vmatprep.subr.mxu0 %v1325
        %1358 = vmatpush1.msra.mxu0 %v1323
        %1359 = vmatprep.subr.mxu0 0.0
        %1360 = vmatpush2.msra.mxu0 0.0
        %1361 = vmatprep.subr.mxu0 0.0
        %1362 = vmatpush2.msra.mxu0 0.0
        %1363 = vmatprep.subr.mxu0 0.0
        %1364 = vmatpush2.msra.mxu0 0.0
        %1365 = vmatprep.subr.mxu0 0.0
        %1366 = vmatpush2.msra.mxu0 0.0
        %1367 = vmatprep.subr.mxu0 0.0
        %1368 = vmatpush2.msra.mxu0 0.0
        %1369 = vmatprep.subr.mxu0 0.0
        %1370 = vmatpush2.msra.mxu0 0.0
        %1371 = vmatprep.subr.mxu0 0.0
        %1372 = vmatpush2.msra.mxu0 0.0
        %1373 = vmatprep.subr.mxu0 0.0
        %1374 = vmatpush2.msra.mxu0 0.0
        %1375 = vmatprep.subr.mxu0 0.0
        %1376 = vmatpush2.msra.mxu0 0.0
        %1377 = vmatprep.subr.mxu0 0.0
        %1378 = vmatpush2.msra.mxu0 0.0
        %1379 = vmatprep.subr.mxu0 0.0
        %1380 = vmatpush2.msra.mxu0 0.0
        %1381 = vmatprep.subr.mxu0 0.0
        %1382 = vmatpush2.msra.mxu0 0.0
        %1383 = vmatprep.subr.mxu0 0.0
        %1384 = vmatpush2.msra.mxu0 0.0
        %1385 = vmatprep.subr.mxu0 0.0
        %1386 = vmatpush2.msra.mxu0 0.0
        %1387 = vmatprep.subr.mxu0 0.0
        %1388 = vmatpush2.msra.mxu0 0.0
        %1389 = vmatprep.subr.mxu0 0.0
        %1390 = vmatpush2.msra.mxu0 0.0
        %1391 = vmatprep.mubr.f32.mxu0 0.0
        %1392 = vmatmul.mubr.f32.gmra.mxu0 %v1321
        %v1393 = vpop.f32.mrf.mxu0
        %v1394 = vadd.f32 0.0, %v1393
        %v1395 = vpop.f32.mrf.mxu0
        %v1396 = vadd.f32 0.0, %v1395
        %1397 = vdwg.mxu0
        %v1398 = vadd.f32 %v1316, %v1394
        %v1399 = vadd.f32 %v1317, %v1396
        %1400 = vrot.lane.b32.xlu0 %v715, 127
        %v1401 = vpop.permute.xlu0 %1400
        %1402 = vrot.lane.b32.xlu0 %v716, 127
        %v1403 = vpop.permute.xlu0 %1402
        %v1404 = vsel %vm267, %v1401, %v1403
        %v1405 = vsel %vm267, %v1403, %v1401
        %v1406 = vmul.f32 %v1404, %v274
        %v1407 = vmul.f32 %v1405, %v278
        %s1408 = scalar_lea.vmem %s3, 56
        %v1409 = vld [vmem:[%s1408] sm:$0xff]
        %v1411 = vsel %vm329, %v1409, 0
        %v1414 = vsel %vm336, %v1406, 0
        %v1417 = vsel %vm336, %v1407, 0
        %1419 = vmatprep.subr.mxu0 0.0
        %1420 = vmatpush1.msra.mxu0 0.0
        %1421 = vmatprep.subr.mxu0 0.0
        %1422 = vmatpush1.msra.mxu0 0.0
        %1423 = vmatprep.subr.mxu0 0.0
        %1424 = vmatpush1.msra.mxu0 0.0
        %1425 = vmatprep.subr.mxu0 0.0
        %1426 = vmatpush1.msra.mxu0 0.0
        %1427 = vmatprep.subr.mxu0 0.0
        %1428 = vmatpush1.msra.mxu0 0.0
        %1429 = vmatprep.subr.mxu0 0.0
        %1430 = vmatpush1.msra.mxu0 0.0
        %1431 = vmatprep.subr.mxu0 0.0
        %1432 = vmatpush1.msra.mxu0 0.0
        %1433 = vmatprep.subr.mxu0 0.0
        %1434 = vmatpush1.msra.mxu0 0.0
        %1435 = vmatprep.subr.mxu0 0.0
        %1436 = vmatpush1.msra.mxu0 0.0
        %1437 = vmatprep.subr.mxu0 0.0
        %1438 = vmatpush1.msra.mxu0 0.0
        %1439 = vmatprep.subr.mxu0 0.0
        %1440 = vmatpush1.msra.mxu0 0.0
        %1441 = vmatprep.subr.mxu0 0.0
        %1442 = vmatpush1.msra.mxu0 0.0
        %1443 = vmatprep.subr.mxu0 0.0
        %1444 = vmatpush1.msra.mxu0 0.0
        %1445 = vmatprep.subr.mxu0 0.0
        %1446 = vmatpush1.msra.mxu0 0.0
        %1447 = vmatprep.subr.mxu0 0.0
        %1448 = vmatpush1.msra.mxu0 0.0
        %1449 = vmatprep.subr.mxu0 %v1417
        %1450 = vmatpush1.msra.mxu0 %v1414
        %1451 = vmatprep.subr.mxu0 0.0
        %1452 = vmatpush2.msra.mxu0 0.0
        %1453 = vmatprep.subr.mxu0 0.0
        %1454 = vmatpush2.msra.mxu0 0.0
        %1455 = vmatprep.subr.mxu0 0.0
        %1456 = vmatpush2.msra.mxu0 0.0
        %1457 = vmatprep.subr.mxu0 0.0
        %1458 = vmatpush2.msra.mxu0 0.0
        %1459 = vmatprep.subr.mxu0 0.0
        %1460 = vmatpush2.msra.mxu0 0.0
        %1461 = vmatprep.subr.mxu0 0.0
        %1462 = vmatpush2.msra.mxu0 0.0
        %1463 = vmatprep.subr.mxu0 0.0
        %1464 = vmatpush2.msra.mxu0 0.0
        %1465 = vmatprep.subr.mxu0 0.0
        %1466 = vmatpush2.msra.mxu0 0.0
        %1467 = vmatprep.subr.mxu0 0.0
        %1468 = vmatpush2.msra.mxu0 0.0
        %1469 = vmatprep.subr.mxu0 0.0
        %1470 = vmatpush2.msra.mxu0 0.0
        %1471 = vmatprep.subr.mxu0 0.0
        %1472 = vmatpush2.msra.mxu0 0.0
        %1473 = vmatprep.subr.mxu0 0.0
        %1474 = vmatpush2.msra.mxu0 0.0
        %1475 = vmatprep.subr.mxu0 0.0
        %1476 = vmatpush2.msra.mxu0 0.0
        %1477 = vmatprep.subr.mxu0 0.0
        %1478 = vmatpush2.msra.mxu0 0.0
        %1479 = vmatprep.subr.mxu0 0.0
        %1480 = vmatpush2.msra.mxu0 0.0
        %1481 = vmatprep.subr.mxu0 0.0
        %1482 = vmatpush2.msra.mxu0 0.0
        %1483 = vmatprep.mubr.f32.mxu0 0.0
        %1484 = vmatmul.mubr.f32.gmra.mxu0 %v1411
        %v1485 = vpop.f32.mrf.mxu0
        %v1486 = vadd.f32 0.0, %v1485
        %v1487 = vpop.f32.mrf.mxu0
        %v1488 = vadd.f32 0.0, %v1487
        %1489 = vdwg.mxu0
        %v1490 = vadd.f32 %v1398, %v1486
        %v1491 = vadd.f32 %v1399, %v1488
        %1492 = vrot.lane.b32.xlu0 %v721, 1
        %v1493 = vpop.permute.xlu0 %1492
        %1494 = vrot.lane.b32.xlu0 %v722, 1
        %v1495 = vpop.permute.xlu0 %1494
        %v1496 = vsel %vm1136, %v1493, %v1495
        %v1497 = vsel %vm1136, %v1495, %v1493
        %v1498 = vmul.f32 %v1497, %v1143
        %v1499 = vmul.f32 %v1496, %v1147
        %s1500 = scalar_lea.vmem %s3, 64
        %v1501 = vld [vmem:[%s1500] sm:$0xff]
        %v1503 = vsel %vm329, %v1501, 0
        %v1506 = vsel %vm336, %v1498, 0
        %v1509 = vsel %vm336, %v1499, 0
        %1511 = vmatprep.subr.mxu0 0.0
        %1512 = vmatpush1.msra.mxu0 0.0
        %1513 = vmatprep.subr.mxu0 0.0
        %1514 = vmatpush1.msra.mxu0 0.0
        %1515 = vmatprep.subr.mxu0 0.0
        %1516 = vmatpush1.msra.mxu0 0.0
        %1517 = vmatprep.subr.mxu0 0.0
        %1518 = vmatpush1.msra.mxu0 0.0
        %1519 = vmatprep.subr.mxu0 0.0
        %1520 = vmatpush1.msra.mxu0 0.0
        %1521 = vmatprep.subr.mxu0 0.0
        %1522 = vmatpush1.msra.mxu0 0.0
        %1523 = vmatprep.subr.mxu0 0.0
        %1524 = vmatpush1.msra.mxu0 0.0
        %1525 = vmatprep.subr.mxu0 0.0
        %1526 = vmatpush1.msra.mxu0 0.0
        %1527 = vmatprep.subr.mxu0 0.0
        %1528 = vmatpush1.msra.mxu0 0.0
        %1529 = vmatprep.subr.mxu0 0.0
        %1530 = vmatpush1.msra.mxu0 0.0
        %1531 = vmatprep.subr.mxu0 0.0
        %1532 = vmatpush1.msra.mxu0 0.0
        %1533 = vmatprep.subr.mxu0 0.0
        %1534 = vmatpush1.msra.mxu0 0.0
        %1535 = vmatprep.subr.mxu0 0.0
        %1536 = vmatpush1.msra.mxu0 0.0
        %1537 = vmatprep.subr.mxu0 0.0
        %1538 = vmatpush1.msra.mxu0 0.0
        %1539 = vmatprep.subr.mxu0 0.0
        %1540 = vmatpush1.msra.mxu0 0.0
        %1541 = vmatprep.subr.mxu0 %v1509
        %1542 = vmatpush1.msra.mxu0 %v1506
        %1543 = vmatprep.subr.mxu0 0.0
        %1544 = vmatpush2.msra.mxu0 0.0
        %1545 = vmatprep.subr.mxu0 0.0
        %1546 = vmatpush2.msra.mxu0 0.0
        %1547 = vmatprep.subr.mxu0 0.0
        %1548 = vmatpush2.msra.mxu0 0.0
        %1549 = vmatprep.subr.mxu0 0.0
        %1550 = vmatpush2.msra.mxu0 0.0
        %1551 = vmatprep.subr.mxu0 0.0
        %1552 = vmatpush2.msra.mxu0 0.0
        %1553 = vmatprep.subr.mxu0 0.0
        %1554 = vmatpush2.msra.mxu0 0.0
        %1555 = vmatprep.subr.mxu0 0.0
        %1556 = vmatpush2.msra.mxu0 0.0
        %1557 = vmatprep.subr.mxu0 0.0
        %1558 = vmatpush2.msra.mxu0 0.0
        %1559 = vmatprep.subr.mxu0 0.0
        %1560 = vmatpush2.msra.mxu0 0.0
        %1561 = vmatprep.subr.mxu0 0.0
        %1562 = vmatpush2.msra.mxu0 0.0
        %1563 = vmatprep.subr.mxu0 0.0
        %1564 = vmatpush2.msra.mxu0 0.0
        %1565 = vmatprep.subr.mxu0 0.0
        %1566 = vmatpush2.msra.mxu0 0.0
        %1567 = vmatprep.subr.mxu0 0.0
        %1568 = vmatpush2.msra.mxu0 0.0
        %1569 = vmatprep.subr.mxu0 0.0
        %1570 = vmatpush2.msra.mxu0 0.0
        %1571 = vmatprep.subr.mxu0 0.0
        %1572 = vmatpush2.msra.mxu0 0.0
        %1573 = vmatprep.subr.mxu0 0.0
        %1574 = vmatpush2.msra.mxu0 0.0
        %1575 = vmatprep.mubr.f32.mxu0 0.0
        %1576 = vmatmul.mubr.f32.gmra.mxu0 %v1503
        %v1577 = vpop.f32.mrf.mxu0
        %v1578 = vadd.f32 0.0, %v1577
        %v1579 = vpop.f32.mrf.mxu0
        %v1580 = vadd.f32 0.0, %v1579
        %1581 = vdwg.mxu0
        %v1582 = vadd.f32 %v1490, %v1578
        %v1583 = vadd.f32 %v1491, %v1580
        %s1584 = scalar_lea.vmem %s3, 72
        %v1585 = vld [vmem:[%s1584] sm:$0xff]
        %v1587 = vsel %vm329, %v1585, 0
        %v1589 = vsel %vm336, %v717, 0
        %v1591 = vsel %vm336, %v718, 0
        %1593 = vmatprep.subr.mxu0 0.0
        %1594 = vmatpush1.msra.mxu0 0.0
        %1595 = vmatprep.subr.mxu0 0.0
        %1596 = vmatpush1.msra.mxu0 0.0
        %1597 = vmatprep.subr.mxu0 0.0
        %1598 = vmatpush1.msra.mxu0 0.0
        %1599 = vmatprep.subr.mxu0 0.0
        %1600 = vmatpush1.msra.mxu0 0.0
        %1601 = vmatprep.subr.mxu0 0.0
        %1602 = vmatpush1.msra.mxu0 0.0
        %1603 = vmatprep.subr.mxu0 0.0
        %1604 = vmatpush1.msra.mxu0 0.0
        %1605 = vmatprep.subr.mxu0 0.0
        %1606 = vmatpush1.msra.mxu0 0.0
        %1607 = vmatprep.subr.mxu0 0.0
        %1608 = vmatpush1.msra.mxu0 0.0
        %1609 = vmatprep.subr.mxu0 0.0
        %1610 = vmatpush1.msra.mxu0 0.0
        %1611 = vmatprep.subr.mxu0 0.0
        %1612 = vmatpush1.msra.mxu0 0.0
        %1613 = vmatprep.subr.mxu0 0.0
        %1614 = vmatpush1.msra.mxu0 0.0
        %1615 = vmatprep.subr.mxu0 0.0
        %1616 = vmatpush1.msra.mxu0 0.0
        %1617 = vmatprep.subr.mxu0 0.0
        %1618 = vmatpush1.msra.mxu0 0.0
        %1619 = vmatprep.subr.mxu0 0.0
        %1620 = vmatpush1.msra.mxu0 0.0
        %1621 = vmatprep.subr.mxu0 0.0
        %1622 = vmatpush1.msra.mxu0 0.0
        %1623 = vmatprep.subr.mxu0 %v1591
        %1624 = vmatpush1.msra.mxu0 %v1589
        %1625 = vmatprep.subr.mxu0 0.0
        %1626 = vmatpush2.msra.mxu0 0.0
        %1627 = vmatprep.subr.mxu0 0.0
        %1628 = vmatpush2.msra.mxu0 0.0
        %1629 = vmatprep.subr.mxu0 0.0
        %1630 = vmatpush2.msra.mxu0 0.0
        %1631 = vmatprep.subr.mxu0 0.0
        %1632 = vmatpush2.msra.mxu0 0.0
        %1633 = vmatprep.subr.mxu0 0.0
        %1634 = vmatpush2.msra.mxu0 0.0
        %1635 = vmatprep.subr.mxu0 0.0
        %1636 = vmatpush2.msra.mxu0 0.0
        %1637 = vmatprep.subr.mxu0 0.0
        %1638 = vmatpush2.msra.mxu0 0.0
        %1639 = vmatprep.subr.mxu0 0.0
        %1640 = vmatpush2.msra.mxu0 0.0
        %1641 = vmatprep.subr.mxu0 0.0
        %1642 = vmatpush2.msra.mxu0 0.0
        %1643 = vmatprep.subr.mxu0 0.0
        %1644 = vmatpush2.msra.mxu0 0.0
        %1645 = vmatprep.subr.mxu0 0.0
        %1646 = vmatpush2.msra.mxu0 0.0
        %1647 = vmatprep.subr.mxu0 0.0
        %1648 = vmatpush2.msra.mxu0 0.0
        %1649 = vmatprep.subr.mxu0 0.0
        %1650 = vmatpush2.msra.mxu0 0.0
        %1651 = vmatprep.subr.mxu0 0.0
        %1652 = vmatpush2.msra.mxu0 0.0
        %1653 = vmatprep.subr.mxu0 0.0
        %1654 = vmatpush2.msra.mxu0 0.0
        %1655 = vmatprep.subr.mxu0 0.0
        %1656 = vmatpush2.msra.mxu0 0.0
        %1657 = vmatprep.mubr.f32.mxu0 0.0
        %1658 = vmatmul.mubr.f32.gmra.mxu0 %v1587
        %v1659 = vpop.f32.mrf.mxu0
        %v1660 = vadd.f32 0.0, %v1659
        %v1661 = vpop.f32.mrf.mxu0
        %v1662 = vadd.f32 0.0, %v1661
        %1663 = vdwg.mxu0
        %v1664 = vadd.f32 %v1582, %v1660
        %v1665 = vadd.f32 %v1583, %v1662
        %s1666 = scalar_lea.vmem %s3, 80
        %v1667 = vld [vmem:[%s1666] sm:$0xff]
        %v1669 = vsel %vm329, %v1667, 0
        %v1671 = vsel %vm336, %v721, 0
        %v1673 = vsel %vm336, %v722, 0
        %1675 = vmatprep.subr.mxu0 0.0
        %1676 = vmatpush1.msra.mxu0 0.0
        %1677 = vmatprep.subr.mxu0 0.0
        %1678 = vmatpush1.msra.mxu0 0.0
        %1679 = vmatprep.subr.mxu0 0.0
        %1680 = vmatpush1.msra.mxu0 0.0
        %1681 = vmatprep.subr.mxu0 0.0
        %1682 = vmatpush1.msra.mxu0 0.0
        %1683 = vmatprep.subr.mxu0 0.0
        %1684 = vmatpush1.msra.mxu0 0.0
        %1685 = vmatprep.subr.mxu0 0.0
        %1686 = vmatpush1.msra.mxu0 0.0
        %1687 = vmatprep.subr.mxu0 0.0
        %1688 = vmatpush1.msra.mxu0 0.0
        %1689 = vmatprep.subr.mxu0 0.0
        %1690 = vmatpush1.msra.mxu0 0.0
        %1691 = vmatprep.subr.mxu0 0.0
        %1692 = vmatpush1.msra.mxu0 0.0
        %1693 = vmatprep.subr.mxu0 0.0
        %1694 = vmatpush1.msra.mxu0 0.0
        %1695 = vmatprep.subr.mxu0 0.0
        %1696 = vmatpush1.msra.mxu0 0.0
        %1697 = vmatprep.subr.mxu0 0.0
        %1698 = vmatpush1.msra.mxu0 0.0
        %1699 = vmatprep.subr.mxu0 0.0
        %1700 = vmatpush1.msra.mxu0 0.0
        %1701 = vmatprep.subr.mxu0 0.0
        %1702 = vmatpush1.msra.mxu0 0.0
        %1703 = vmatprep.subr.mxu0 0.0
        %1704 = vmatpush1.msra.mxu0 0.0
        %1705 = vmatprep.subr.mxu0 %v1673
        %1706 = vmatpush1.msra.mxu0 %v1671
        %1707 = vmatprep.subr.mxu0 0.0
        %1708 = vmatpush2.msra.mxu0 0.0
        %1709 = vmatprep.subr.mxu0 0.0
        %1710 = vmatpush2.msra.mxu0 0.0
        %1711 = vmatprep.subr.mxu0 0.0
        %1712 = vmatpush2.msra.mxu0 0.0
        %1713 = vmatprep.subr.mxu0 0.0
        %1714 = vmatpush2.msra.mxu0 0.0
        %1715 = vmatprep.subr.mxu0 0.0
        %1716 = vmatpush2.msra.mxu0 0.0
        %1717 = vmatprep.subr.mxu0 0.0
        %1718 = vmatpush2.msra.mxu0 0.0
        %1719 = vmatprep.subr.mxu0 0.0
        %1720 = vmatpush2.msra.mxu0 0.0
        %1721 = vmatprep.subr.mxu0 0.0
        %1722 = vmatpush2.msra.mxu0 0.0
        %1723 = vmatprep.subr.mxu0 0.0
        %1724 = vmatpush2.msra.mxu0 0.0
        %1725 = vmatprep.subr.mxu0 0.0
        %1726 = vmatpush2.msra.mxu0 0.0
        %1727 = vmatprep.subr.mxu0 0.0
        %1728 = vmatpush2.msra.mxu0 0.0
        %1729 = vmatprep.subr.mxu0 0.0
        %1730 = vmatpush2.msra.mxu0 0.0
        %1731 = vmatprep.subr.mxu0 0.0
        %1732 = vmatpush2.msra.mxu0 0.0
        %1733 = vmatprep.subr.mxu0 0.0
        %1734 = vmatpush2.msra.mxu0 0.0
        %1735 = vmatprep.subr.mxu0 0.0
        %1736 = vmatpush2.msra.mxu0 0.0
        %1737 = vmatprep.subr.mxu0 0.0
        %1738 = vmatpush2.msra.mxu0 0.0
        %1739 = vmatprep.mubr.f32.mxu0 0.0
        %1740 = vmatmul.mubr.f32.gmra.mxu0 %v1669
        %v1741 = vpop.f32.mrf.mxu0
        %v1742 = vadd.f32 0.0, %v1741
        %v1743 = vpop.f32.mrf.mxu0
        %v1744 = vadd.f32 0.0, %v1743
        %1745 = vdwg.mxu0
        %v1746 = vadd.f32 %v1664, %v1742
        %v1747 = vadd.f32 %v1665, %v1744
        %1748 = vrot.lane.b32.xlu0 %v717, 127
        %v1749 = vpop.permute.xlu0 %1748
        %1750 = vrot.lane.b32.xlu0 %v718, 127
        %v1751 = vpop.permute.xlu0 %1750
        %v1752 = vsel %vm267, %v1749, %v1751
        %v1753 = vsel %vm267, %v1751, %v1749
        %v1754 = vmul.f32 %v1752, %v274
        %v1755 = vmul.f32 %v1753, %v278
        %s1756 = scalar_lea.vmem %s3, 88
        %v1757 = vld [vmem:[%s1756] sm:$0xff]
        %v1759 = vsel %vm329, %v1757, 0
        %v1762 = vsel %vm336, %v1754, 0
        %v1765 = vsel %vm336, %v1755, 0
        %1767 = vmatprep.subr.mxu0 0.0
        %1768 = vmatpush1.msra.mxu0 0.0
        %1769 = vmatprep.subr.mxu0 0.0
        %1770 = vmatpush1.msra.mxu0 0.0
        %1771 = vmatprep.subr.mxu0 0.0
        %1772 = vmatpush1.msra.mxu0 0.0
        %1773 = vmatprep.subr.mxu0 0.0
        %1774 = vmatpush1.msra.mxu0 0.0
        %1775 = vmatprep.subr.mxu0 0.0
        %1776 = vmatpush1.msra.mxu0 0.0
        %1777 = vmatprep.subr.mxu0 0.0
        %1778 = vmatpush1.msra.mxu0 0.0
        %1779 = vmatprep.subr.mxu0 0.0
        %1780 = vmatpush1.msra.mxu0 0.0
        %1781 = vmatprep.subr.mxu0 0.0
        %1782 = vmatpush1.msra.mxu0 0.0
        %1783 = vmatprep.subr.mxu0 0.0
        %1784 = vmatpush1.msra.mxu0 0.0
        %1785 = vmatprep.subr.mxu0 0.0
        %1786 = vmatpush1.msra.mxu0 0.0
        %1787 = vmatprep.subr.mxu0 0.0
        %1788 = vmatpush1.msra.mxu0 0.0
        %1789 = vmatprep.subr.mxu0 0.0
        %1790 = vmatpush1.msra.mxu0 0.0
        %1791 = vmatprep.subr.mxu0 0.0
        %1792 = vmatpush1.msra.mxu0 0.0
        %1793 = vmatprep.subr.mxu0 0.0
        %1794 = vmatpush1.msra.mxu0 0.0
        %1795 = vmatprep.subr.mxu0 0.0
        %1796 = vmatpush1.msra.mxu0 0.0
        %1797 = vmatprep.subr.mxu0 %v1765
        %1798 = vmatpush1.msra.mxu0 %v1762
        %1799 = vmatprep.subr.mxu0 0.0
        %1800 = vmatpush2.msra.mxu0 0.0
        %1801 = vmatprep.subr.mxu0 0.0
        %1802 = vmatpush2.msra.mxu0 0.0
        %1803 = vmatprep.subr.mxu0 0.0
        %1804 = vmatpush2.msra.mxu0 0.0
        %1805 = vmatprep.subr.mxu0 0.0
        %1806 = vmatpush2.msra.mxu0 0.0
        %1807 = vmatprep.subr.mxu0 0.0
        %1808 = vmatpush2.msra.mxu0 0.0
        %1809 = vmatprep.subr.mxu0 0.0
        %1810 = vmatpush2.msra.mxu0 0.0
        %1811 = vmatprep.subr.mxu0 0.0
        %1812 = vmatpush2.msra.mxu0 0.0
        %1813 = vmatprep.subr.mxu0 0.0
        %1814 = vmatpush2.msra.mxu0 0.0
        %1815 = vmatprep.subr.mxu0 0.0
        %1816 = vmatpush2.msra.mxu0 0.0
        %1817 = vmatprep.subr.mxu0 0.0
        %1818 = vmatpush2.msra.mxu0 0.0
        %1819 = vmatprep.subr.mxu0 0.0
        %1820 = vmatpush2.msra.mxu0 0.0
        %1821 = vmatprep.subr.mxu0 0.0
        %1822 = vmatpush2.msra.mxu0 0.0
        %1823 = vmatprep.subr.mxu0 0.0
        %1824 = vmatpush2.msra.mxu0 0.0
        %1825 = vmatprep.subr.mxu0 0.0
        %1826 = vmatpush2.msra.mxu0 0.0
        %1827 = vmatprep.subr.mxu0 0.0
        %1828 = vmatpush2.msra.mxu0 0.0
        %1829 = vmatprep.subr.mxu0 0.0
        %1830 = vmatpush2.msra.mxu0 0.0
        %1831 = vmatprep.mubr.f32.mxu0 0.0
        %1832 = vmatmul.mubr.f32.gmra.mxu0 %v1759
        %v1833 = vpop.f32.mrf.mxu0
        %v1834 = vadd.f32 0.0, %v1833
        %v1835 = vpop.f32.mrf.mxu0
        %v1836 = vadd.f32 0.0, %v1835
        %1837 = vdwg.mxu0
        %v1838 = vadd.f32 %v1746, %v1834
        %v1839 = vadd.f32 %v1747, %v1836
        %1840 = vrot.lane.b32.xlu0 %v1128, 113
        %v1841 = vpop.permute.xlu0 %1840
        %1842 = vrot.lane.b32.xlu0 %v1129, 113
        %v1843 = vpop.permute.xlu0 %1842
        %vm1844 = vcmp.lt.s32.totalorder %v266, 113
        %v1845 = vsel %vm1844, %v1841, %v1843
        %v1846 = vsel %vm1844, %v1843, %v1841
        %v1847 = vmul.f32 %v252, %v254
        %v1849 = vlaneseq
        %v1850 = vshrl.u32 %v1849, 7
        %v1851 = vsub.s32 0, %v1850
        %v1852 = vrot.slane %v1847, %v1851
        %v1853 = vlaneseq
        %v1854 = vshrl.u32 %v1853, 7
        %v1855 = vsub.s32 1, %v1854
        %v1856 = vrot.slane %v1847, %v1855
        %v1859 = vmul.f32 %v1845, %v1852
        %v1860 = vmul.f32 %v1846, %v1856
        %s1861 = scalar_lea.vmem %s3, 96
        %v1862 = vld [vmem:[%s1861] sm:$0xff]
        %v1864 = vsel %vm329, %v1862, 0
        %v1867 = vsel %vm336, %v1859, 0
        %v1870 = vsel %vm336, %v1860, 0
        %1872 = vmatprep.subr.mxu0 0.0
        %1873 = vmatpush1.msra.mxu0 0.0
        %1874 = vmatprep.subr.mxu0 0.0
        %1875 = vmatpush1.msra.mxu0 0.0
        %1876 = vmatprep.subr.mxu0 0.0
        %1877 = vmatpush1.msra.mxu0 0.0
        %1878 = vmatprep.subr.mxu0 0.0
        %1879 = vmatpush1.msra.mxu0 0.0
        %1880 = vmatprep.subr.mxu0 0.0
        %1881 = vmatpush1.msra.mxu0 0.0
        %1882 = vmatprep.subr.mxu0 0.0
        %1883 = vmatpush1.msra.mxu0 0.0
        %1884 = vmatprep.subr.mxu0 0.0
        %1885 = vmatpush1.msra.mxu0 0.0
        %1886 = vmatprep.subr.mxu0 0.0
        %1887 = vmatpush1.msra.mxu0 0.0
        %1888 = vmatprep.subr.mxu0 0.0
        %1889 = vmatpush1.msra.mxu0 0.0
        %1890 = vmatprep.subr.mxu0 0.0
        %1891 = vmatpush1.msra.mxu0 0.0
        %1892 = vmatprep.subr.mxu0 0.0
        %1893 = vmatpush1.msra.mxu0 0.0
        %1894 = vmatprep.subr.mxu0 0.0
        %1895 = vmatpush1.msra.mxu0 0.0
        %1896 = vmatprep.subr.mxu0 0.0
        %1897 = vmatpush1.msra.mxu0 0.0
        %1898 = vmatprep.subr.mxu0 0.0
        %1899 = vmatpush1.msra.mxu0 0.0
        %1900 = vmatprep.subr.mxu0 0.0
        %1901 = vmatpush1.msra.mxu0 0.0
        %1902 = vmatprep.subr.mxu0 %v1870
        %1903 = vmatpush1.msra.mxu0 %v1867
        %1904 = vmatprep.subr.mxu0 0.0
        %1905 = vmatpush2.msra.mxu0 0.0
        %1906 = vmatprep.subr.mxu0 0.0
        %1907 = vmatpush2.msra.mxu0 0.0
        %1908 = vmatprep.subr.mxu0 0.0
        %1909 = vmatpush2.msra.mxu0 0.0
        %1910 = vmatprep.subr.mxu0 0.0
        %1911 = vmatpush2.msra.mxu0 0.0
        %1912 = vmatprep.subr.mxu0 0.0
        %1913 = vmatpush2.msra.mxu0 0.0
        %1914 = vmatprep.subr.mxu0 0.0
        %1915 = vmatpush2.msra.mxu0 0.0
        %1916 = vmatprep.subr.mxu0 0.0
        %1917 = vmatpush2.msra.mxu0 0.0
        %1918 = vmatprep.subr.mxu0 0.0
        %1919 = vmatpush2.msra.mxu0 0.0
        %1920 = vmatprep.subr.mxu0 0.0
        %1921 = vmatpush2.msra.mxu0 0.0
        %1922 = vmatprep.subr.mxu0 0.0
        %1923 = vmatpush2.msra.mxu0 0.0
        %1924 = vmatprep.subr.mxu0 0.0
        %1925 = vmatpush2.msra.mxu0 0.0
        %1926 = vmatprep.subr.mxu0 0.0
        %1927 = vmatpush2.msra.mxu0 0.0
        %1928 = vmatprep.subr.mxu0 0.0
        %1929 = vmatpush2.msra.mxu0 0.0
        %1930 = vmatprep.subr.mxu0 0.0
        %1931 = vmatpush2.msra.mxu0 0.0
        %1932 = vmatprep.subr.mxu0 0.0
        %1933 = vmatpush2.msra.mxu0 0.0
        %1934 = vmatprep.subr.mxu0 0.0
        %1935 = vmatpush2.msra.mxu0 0.0
        %1936 = vmatprep.mubr.f32.mxu0 0.0
        %1937 = vmatmul.mubr.f32.gmra.mxu0 %v1864
        %v1938 = vpop.f32.mrf.mxu0
        %v1939 = vadd.f32 0.0, %v1938
        %v1940 = vpop.f32.mrf.mxu0
        %v1941 = vadd.f32 0.0, %v1940
        %1942 = vdwg.mxu0
        %v1943 = vadd.f32 %v1838, %v1939
        %v1944 = vadd.f32 %v1839, %v1941
        %1945 = vrot.lane.b32.xlu0 %v715, 112
        %v1946 = vpop.permute.xlu0 %1945
        %1947 = vrot.lane.b32.xlu0 %v716, 112
        %v1948 = vpop.permute.xlu0 %1947
        %v1949 = vsel %vm287, %v1946, %v1948
        %v1950 = vsel %vm287, %v1948, %v1946
        %v1951 = vmul.f32 %v1949, %v294
        %v1952 = vmul.f32 %v1950, %v298
        %s1953 = scalar_lea.vmem %s3, 104
        %v1954 = vld [vmem:[%s1953] sm:$0xff]
        %v1956 = vsel %vm329, %v1954, 0
        %v1959 = vsel %vm336, %v1951, 0
        %v1962 = vsel %vm336, %v1952, 0
        %1964 = vmatprep.subr.mxu0 0.0
        %1965 = vmatpush1.msra.mxu0 0.0
        %1966 = vmatprep.subr.mxu0 0.0
        %1967 = vmatpush1.msra.mxu0 0.0
        %1968 = vmatprep.subr.mxu0 0.0
        %1969 = vmatpush1.msra.mxu0 0.0
        %1970 = vmatprep.subr.mxu0 0.0
        %1971 = vmatpush1.msra.mxu0 0.0
        %1972 = vmatprep.subr.mxu0 0.0
        %1973 = vmatpush1.msra.mxu0 0.0
        %1974 = vmatprep.subr.mxu0 0.0
        %1975 = vmatpush1.msra.mxu0 0.0
        %1976 = vmatprep.subr.mxu0 0.0
        %1977 = vmatpush1.msra.mxu0 0.0
        %1978 = vmatprep.subr.mxu0 0.0
        %1979 = vmatpush1.msra.mxu0 0.0
        %1980 = vmatprep.subr.mxu0 0.0
        %1981 = vmatpush1.msra.mxu0 0.0
        %1982 = vmatprep.subr.mxu0 0.0
        %1983 = vmatpush1.msra.mxu0 0.0
        %1984 = vmatprep.subr.mxu0 0.0
        %1985 = vmatpush1.msra.mxu0 0.0
        %1986 = vmatprep.subr.mxu0 0.0
        %1987 = vmatpush1.msra.mxu0 0.0
        %1988 = vmatprep.subr.mxu0 0.0
        %1989 = vmatpush1.msra.mxu0 0.0
        %1990 = vmatprep.subr.mxu0 0.0
        %1991 = vmatpush1.msra.mxu0 0.0
        %1992 = vmatprep.subr.mxu0 0.0
        %1993 = vmatpush1.msra.mxu0 0.0
        %1994 = vmatprep.subr.mxu0 %v1962
        %1995 = vmatpush1.msra.mxu0 %v1959
        %1996 = vmatprep.subr.mxu0 0.0
        %1997 = vmatpush2.msra.mxu0 0.0
        %1998 = vmatprep.subr.mxu0 0.0
        %1999 = vmatpush2.msra.mxu0 0.0
        %2000 = vmatprep.subr.mxu0 0.0
        %2001 = vmatpush2.msra.mxu0 0.0
        %2002 = vmatprep.subr.mxu0 0.0
        %2003 = vmatpush2.msra.mxu0 0.0
        %2004 = vmatprep.subr.mxu0 0.0
        %2005 = vmatpush2.msra.mxu0 0.0
        %2006 = vmatprep.subr.mxu0 0.0
        %2007 = vmatpush2.msra.mxu0 0.0
        %2008 = vmatprep.subr.mxu0 0.0
        %2009 = vmatpush2.msra.mxu0 0.0
        %2010 = vmatprep.subr.mxu0 0.0
        %2011 = vmatpush2.msra.mxu0 0.0
        %2012 = vmatprep.subr.mxu0 0.0
        %2013 = vmatpush2.msra.mxu0 0.0
        %2014 = vmatprep.subr.mxu0 0.0
        %2015 = vmatpush2.msra.mxu0 0.0
        %2016 = vmatprep.subr.mxu0 0.0
        %2017 = vmatpush2.msra.mxu0 0.0
        %2018 = vmatprep.subr.mxu0 0.0
        %2019 = vmatpush2.msra.mxu0 0.0
        %2020 = vmatprep.subr.mxu0 0.0
        %2021 = vmatpush2.msra.mxu0 0.0
        %2022 = vmatprep.subr.mxu0 0.0
        %2023 = vmatpush2.msra.mxu0 0.0
        %2024 = vmatprep.subr.mxu0 0.0
        %2025 = vmatpush2.msra.mxu0 0.0
        %2026 = vmatprep.subr.mxu0 0.0
        %2027 = vmatpush2.msra.mxu0 0.0
        %2028 = vmatprep.mubr.f32.mxu0 0.0
        %2029 = vmatmul.mubr.f32.gmra.mxu0 %v1956
        %v2030 = vpop.f32.mrf.mxu0
        %v2031 = vadd.f32 0.0, %v2030
        %v2032 = vpop.f32.mrf.mxu0
        %v2033 = vadd.f32 0.0, %v2032
        %2034 = vdwg.mxu0
        %v2035 = vadd.f32 %v1943, %v2031
        %v2036 = vadd.f32 %v1944, %v2033
        %2037 = vrot.lane.b32.xlu0 %v1128, 112
        %v2038 = vpop.permute.xlu0 %2037
        %2039 = vrot.lane.b32.xlu0 %v1129, 112
        %v2040 = vpop.permute.xlu0 %2039
        %v2041 = vsel %vm287, %v2038, %v2040
        %v2042 = vsel %vm287, %v2040, %v2038
        %v2043 = vmul.f32 %v2041, %v294
        %v2044 = vmul.f32 %v2042, %v298
        %s2045 = scalar_lea.vmem %s3, 112
        %v2046 = vld [vmem:[%s2045] sm:$0xff]
        %v2048 = vsel %vm329, %v2046, 0
        %v2051 = vsel %vm336, %v2043, 0
        %v2054 = vsel %vm336, %v2044, 0
        %2056 = vmatprep.subr.mxu0 0.0
        %2057 = vmatpush1.msra.mxu0 0.0
        %2058 = vmatprep.subr.mxu0 0.0
        %2059 = vmatpush1.msra.mxu0 0.0
        %2060 = vmatprep.subr.mxu0 0.0
        %2061 = vmatpush1.msra.mxu0 0.0
        %2062 = vmatprep.subr.mxu0 0.0
        %2063 = vmatpush1.msra.mxu0 0.0
        %2064 = vmatprep.subr.mxu0 0.0
        %2065 = vmatpush1.msra.mxu0 0.0
        %2066 = vmatprep.subr.mxu0 0.0
        %2067 = vmatpush1.msra.mxu0 0.0
        %2068 = vmatprep.subr.mxu0 0.0
        %2069 = vmatpush1.msra.mxu0 0.0
        %2070 = vmatprep.subr.mxu0 0.0
        %2071 = vmatpush1.msra.mxu0 0.0
        %2072 = vmatprep.subr.mxu0 0.0
        %2073 = vmatpush1.msra.mxu0 0.0
        %2074 = vmatprep.subr.mxu0 0.0
        %2075 = vmatpush1.msra.mxu0 0.0
        %2076 = vmatprep.subr.mxu0 0.0
        %2077 = vmatpush1.msra.mxu0 0.0
        %2078 = vmatprep.subr.mxu0 0.0
        %2079 = vmatpush1.msra.mxu0 0.0
        %2080 = vmatprep.subr.mxu0 0.0
        %2081 = vmatpush1.msra.mxu0 0.0
        %2082 = vmatprep.subr.mxu0 0.0
        %2083 = vmatpush1.msra.mxu0 0.0
        %2084 = vmatprep.subr.mxu0 0.0
        %2085 = vmatpush1.msra.mxu0 0.0
        %2086 = vmatprep.subr.mxu0 %v2054
        %2087 = vmatpush1.msra.mxu0 %v2051
        %2088 = vmatprep.subr.mxu0 0.0
        %2089 = vmatpush2.msra.mxu0 0.0
        %2090 = vmatprep.subr.mxu0 0.0
        %2091 = vmatpush2.msra.mxu0 0.0
        %2092 = vmatprep.subr.mxu0 0.0
        %2093 = vmatpush2.msra.mxu0 0.0
        %2094 = vmatprep.subr.mxu0 0.0
        %2095 = vmatpush2.msra.mxu0 0.0
        %2096 = vmatprep.subr.mxu0 0.0
        %2097 = vmatpush2.msra.mxu0 0.0
        %2098 = vmatprep.subr.mxu0 0.0
        %2099 = vmatpush2.msra.mxu0 0.0
        %2100 = vmatprep.subr.mxu0 0.0
        %2101 = vmatpush2.msra.mxu0 0.0
        %2102 = vmatprep.subr.mxu0 0.0
        %2103 = vmatpush2.msra.mxu0 0.0
        %2104 = vmatprep.subr.mxu0 0.0
        %2105 = vmatpush2.msra.mxu0 0.0
        %2106 = vmatprep.subr.mxu0 0.0
        %2107 = vmatpush2.msra.mxu0 0.0
        %2108 = vmatprep.subr.mxu0 0.0
        %2109 = vmatpush2.msra.mxu0 0.0
        %2110 = vmatprep.subr.mxu0 0.0
        %2111 = vmatpush2.msra.mxu0 0.0
        %2112 = vmatprep.subr.mxu0 0.0
        %2113 = vmatpush2.msra.mxu0 0.0
        %2114 = vmatprep.subr.mxu0 0.0
        %2115 = vmatpush2.msra.mxu0 0.0
        %2116 = vmatprep.subr.mxu0 0.0
        %2117 = vmatpush2.msra.mxu0 0.0
        %2118 = vmatprep.subr.mxu0 0.0
        %2119 = vmatpush2.msra.mxu0 0.0
        %2120 = vmatprep.mubr.f32.mxu0 0.0
        %2121 = vmatmul.mubr.f32.gmra.mxu0 %v2048
        %v2122 = vpop.f32.mrf.mxu0
        %v2123 = vadd.f32 0.0, %v2122
        %v2124 = vpop.f32.mrf.mxu0
        %v2125 = vadd.f32 0.0, %v2124
        %2126 = vdwg.mxu0
        %v2127 = vadd.f32 %v2035, %v2123
        %v2128 = vadd.f32 %v2036, %v2125
        %2129 = vrot.lane.b32.xlu0 %v715, 111
        %v2130 = vpop.permute.xlu0 %2129
        %2131 = vrot.lane.b32.xlu0 %v716, 111
        %v2132 = vpop.permute.xlu0 %2131
        %v2133 = vsel %vm307, %v2130, %v2132
        %v2134 = vsel %vm307, %v2132, %v2130
        %v2135 = vmul.f32 %v2133, %v315
        %v2136 = vmul.f32 %v2134, %v319
        %s2137 = scalar_lea.vmem %s3, 120
        %v2138 = vld [vmem:[%s2137] sm:$0xff]
        %v2140 = vsel %vm329, %v2138, 0
        %v2143 = vsel %vm336, %v2135, 0
        %v2146 = vsel %vm336, %v2136, 0
        %2148 = vmatprep.subr.mxu0 0.0
        %2149 = vmatpush1.msra.mxu0 0.0
        %2150 = vmatprep.subr.mxu0 0.0
        %2151 = vmatpush1.msra.mxu0 0.0
        %2152 = vmatprep.subr.mxu0 0.0
        %2153 = vmatpush1.msra.mxu0 0.0
        %2154 = vmatprep.subr.mxu0 0.0
        %2155 = vmatpush1.msra.mxu0 0.0
        %2156 = vmatprep.subr.mxu0 0.0
        %2157 = vmatpush1.msra.mxu0 0.0
        %2158 = vmatprep.subr.mxu0 0.0
        %2159 = vmatpush1.msra.mxu0 0.0
        %2160 = vmatprep.subr.mxu0 0.0
        %2161 = vmatpush1.msra.mxu0 0.0
        %2162 = vmatprep.subr.mxu0 0.0
        %2163 = vmatpush1.msra.mxu0 0.0
        %2164 = vmatprep.subr.mxu0 0.0
        %2165 = vmatpush1.msra.mxu0 0.0
        %2166 = vmatprep.subr.mxu0 0.0
        %2167 = vmatpush1.msra.mxu0 0.0
        %2168 = vmatprep.subr.mxu0 0.0
        %2169 = vmatpush1.msra.mxu0 0.0
        %2170 = vmatprep.subr.mxu0 0.0
        %2171 = vmatpush1.msra.mxu0 0.0
        %2172 = vmatprep.subr.mxu0 0.0
        %2173 = vmatpush1.msra.mxu0 0.0
        %2174 = vmatprep.subr.mxu0 0.0
        %2175 = vmatpush1.msra.mxu0 0.0
        %2176 = vmatprep.subr.mxu0 0.0
        %2177 = vmatpush1.msra.mxu0 0.0
        %2178 = vmatprep.subr.mxu0 %v2146
        %2179 = vmatpush1.msra.mxu0 %v2143
        %2180 = vmatprep.subr.mxu0 0.0
        %2181 = vmatpush2.msra.mxu0 0.0
        %2182 = vmatprep.subr.mxu0 0.0
        %2183 = vmatpush2.msra.mxu0 0.0
        %2184 = vmatprep.subr.mxu0 0.0
        %2185 = vmatpush2.msra.mxu0 0.0
        %2186 = vmatprep.subr.mxu0 0.0
        %2187 = vmatpush2.msra.mxu0 0.0
        %2188 = vmatprep.subr.mxu0 0.0
        %2189 = vmatpush2.msra.mxu0 0.0
        %2190 = vmatprep.subr.mxu0 0.0
        %2191 = vmatpush2.msra.mxu0 0.0
        %2192 = vmatprep.subr.mxu0 0.0
        %2193 = vmatpush2.msra.mxu0 0.0
        %2194 = vmatprep.subr.mxu0 0.0
        %2195 = vmatpush2.msra.mxu0 0.0
        %2196 = vmatprep.subr.mxu0 0.0
        %2197 = vmatpush2.msra.mxu0 0.0
        %2198 = vmatprep.subr.mxu0 0.0
        %2199 = vmatpush2.msra.mxu0 0.0
        %2200 = vmatprep.subr.mxu0 0.0
        %2201 = vmatpush2.msra.mxu0 0.0
        %2202 = vmatprep.subr.mxu0 0.0
        %2203 = vmatpush2.msra.mxu0 0.0
        %2204 = vmatprep.subr.mxu0 0.0
        %2205 = vmatpush2.msra.mxu0 0.0
        %2206 = vmatprep.subr.mxu0 0.0
        %2207 = vmatpush2.msra.mxu0 0.0
        %2208 = vmatprep.subr.mxu0 0.0
        %2209 = vmatpush2.msra.mxu0 0.0
        %2210 = vmatprep.subr.mxu0 0.0
        %2211 = vmatpush2.msra.mxu0 0.0
        %2212 = vmatprep.mubr.f32.mxu0 0.0
        %2213 = vmatmul.mubr.f32.gmra.mxu0 %v2140
        %v2214 = vpop.f32.mrf.mxu0
        %v2215 = vadd.f32 0.0, %v2214
        %v2216 = vpop.f32.mrf.mxu0
        %v2217 = vadd.f32 0.0, %v2216
        %2218 = vdwg.mxu0
        %v2219 = vadd.f32 %v2127, %v2215
        %v2220 = vadd.f32 %v2128, %v2217
        %v2221 = vld [vmem:[%s4] sm:$0xff]
        %2223 = vset.pattern.permute.xlu0 0
        %2224 = vperm.xlu0 %2223, %v2221
        %v2225 = vpop.permute.xlu0 %2224
        %v2227 = vadd.f32 %v2219, %v2225
        %v2228 = vadd.f32 %v2220, %v2225
        %v2229 = vmax.f32 %v2227, 0.0
        %v2230 = vmax.f32 %v2228, 0.0
        %2231 = vst [vmem:[%s244] sm:$0xff] %v2229
        %2232 = vst [vmem:[%s244 + $0x8] sm:$0xff] %v2230
        %s2233 = sand.u32 %s159, 1
        %s2234 = scalar_lea.sflag [#allocation3], %s2233
        %s2235 = sand.u32 %s159, 1
        %s2236 = smul.addr %s2235, 16
        %s2237 = scalar_lea.vmem [#allocation2], %s2236
        // Predicated region
        $region45: #{tpu_custom_call.1} parent=43 // pred_check
          %p2238 = pneg %p169
        $region46: #{tpu_custom_call.1} parent=43 // pred_check_branch
          %2240 = sbr.rel (%p2238) target = $region48
        $region47: #{tpu_custom_call.1} parent=43 // pred_region
          %s2242 = ssub.s32 256, 256
          %2243 = vsyncadd %s2234, %s2242
          %s2244 = smul.addr %s20, 2
          %s2245 = smul.addr %s2244, 128
          %s2246 = scalar_lea.hbm %s6, %s2245
          %s2248 = sshll.u32 %s2237, 4
          %s2249 = int_to_ptr.vmem [resolvable:$true] %s2248
          %2251 = dma.vmem_to_hbm [thread:$0]  %s2249, 256, %s2246, %s2234
        $region48: #{tpu_custom_call.1} parent=43 // pred_fallthru
          _
      $region44: #{tpu_custom_call.1} parent=5 // pred_fallthru
        _
      %p2252 = scmp.le.s32.totalorder 2, %s15
      // Predicated region
      $region49: #{tpu_custom_call.1} parent=5 // pred_check
        %p2253 = pneg %p2252
      $region50: #{tpu_custom_call.1} parent=5 // pred_check_branch
        %2255 = sbr.rel (%p2253) target = $region52
      $region51: #{tpu_custom_call.1} parent=5 // pred_region
        %s2256 = ssub.s32 %s15, 2
        // Predicated region
        $region53: #{tpu_custom_call.1} parent=51 // pred_check
          %p2257 = pneg %p175
        $region54: #{tpu_custom_call.1} parent=51 // pred_check_branch
          %2259 = sbr.rel (%p2257) target = $region56
        $region55: #{tpu_custom_call.1} parent=51 // pred_region
          %s2260 = sand.u32 %s160, 1
          %s2261 = scalar_lea.sflag [#allocation3], %s2260
          %s2262 = sand.u32 %s160, 1
          %s2263 = smul.addr %s2262, 16
          %s2264 = scalar_lea.vmem [#allocation2], %s2263
          %2265 = dma.done %s2261, 256
        $region56: #{tpu_custom_call.1} parent=51 // pred_fallthru
          _
      $region52: #{tpu_custom_call.1} parent=5 // pred_fallthru
        _
    $region6: #{tpu_custom_call.1} parent=1 // loop_footer
      %s19 = sadd.s32 1, %s15
    $region7: #{tpu_custom_call.1} parent=1 // loop_footer_branch
      %14 = sbr.rel target = $region3
    $region8: #{tpu_custom_call.1} parent=1 // loop_exit
      _
    %2266 = vsyncpa [#allocation3], 1
    %s2267 = scalar_lea.sflag [#allocation3], 1
    %2268 = vsyncpa %s2267, 1

</llo_original>
